<compile_context>
chip_gen: v7x
topology: tpu7x:2x2x1
jax: 0.10.0
libtpu: 0.0.40
codegen_flags: <defaults>
</compile_context>

<pallas_src>
import functools
import math

import jax
import jax.numpy as jnp
from jax import lax
from jax.experimental import pallas as pl
from jax.experimental.pallas import tpu as pltpu

# Order of the 9 stacked projection weights / biases (matches the PyTorch module).
E_WK, E_WV, E_WQ, D_WK, D_WV, D_WQ, C_WK, C_WV, C_WQ = range(9)

LANE = 128          # TPU vreg lane width
NEG_BIG = -1e30     # bias fill for padded vocab lanes (exp underflows to 0)


# --------------------------------------------------------------------------- #
# Kernel
# --------------------------------------------------------------------------- #
def encoder_decoder_kernel(enc_ref, dec_ref,
                           w_e_ref, b_e_ref,        # encoder  Q|K|V  [Ep, 3Hp]
                           w_d_ref, b_d_ref,        # decoder  Q|K|V  [Ep, 3Hp]
                           w_ckv_ref, b_ckv_ref,    # cross    K|V    [Ep, 2Hp]
                           w_cq_ref, b_cq_ref,      # cross    Q      [Ep, Hp]
                           w_o_ref, b_o_ref,        # output   [Hp, Vp], [1, Vp]
                           mask_ref,                # causal additive mask [Sd, Sd]
                           out_ref,                 # [Sd, Vp]
                           *, h_pad, compute_dtype):
    enc = enc_ref[...].astype(compute_dtype)        # [Se, Ep]
    dec = dec_ref[...].astype(compute_dtype)        # [Sd, Ep]

    def proj(x, w_ref, b_ref):
        # One fat matmul for the whole projection slab.
        return jnp.dot(x, w_ref[...].astype(compute_dtype),
                       preferred_element_type=jnp.float32) + b_ref[...]

    def scores(q, k):
        # q @ k^T without materializing a transpose: contract dim 1 of both.
        return lax.dot_general(q.astype(compute_dtype), k.astype(compute_dtype),
                               dimension_numbers=(((1,), (1,)), ((), ())),
                               preferred_element_type=jnp.float32)

    def softmax_last(s):
        m = jnp.max(s, axis=-1, keepdims=True)
        e = jnp.exp(s - m)
        inv = pl.reciprocal(jnp.sum(e, axis=-1, keepdims=True), approx=True)
        return e * inv

    def attend(p, v):
        return jnp.dot(p.astype(compute_dtype), v.astype(compute_dtype),
                       preferred_element_type=jnp.float32)

    # ---- encoder self-attention (scale folded into Q weights) ----
    e_qkv = proj(enc, w_e_ref, b_e_ref)
    e_q = e_qkv[:, :h_pad]
    e_k = e_qkv[:, h_pad:2 * h_pad]
    e_v = e_qkv[:, 2 * h_pad:]
    enc_states = attend(softmax_last(scores(e_q, e_k)), e_v)

    # ---- decoder self-attention (causal mask, NOT scaled — matches reference) ----
    d_qkv = proj(dec, w_d_ref, b_d_ref)
    d_q = d_qkv[:, :h_pad]
    d_k = d_qkv[:, h_pad:2 * h_pad]
    d_v = d_qkv[:, 2 * h_pad:]
    d_s = scores(d_q, d_k) + mask_ref[...]
    dec_states = attend(softmax_last(d_s), d_v)

    # ---- cross attention: Q from decoder states (scale folded), K|V from encoder states ----
    c_q = proj(dec_states, w_cq_ref, b_cq_ref)
    c_kv = proj(enc_states, w_ckv_ref, b_ckv_ref)
    c_k = c_kv[:, :h_pad]
    c_v = c_kv[:, h_pad:]
    cross_states = attend(softmax_last(scores(c_q, c_k)), c_v)

    final_rep = cross_states + dec_states

    # ---- output projection + log_softmax over dim=1 ----
    logits = jnp.dot(final_rep.astype(compute_dtype),
                     w_o_ref[...].astype(compute_dtype),
                     preferred_element_type=jnp.float32) + b_o_ref[...]
    m = jnp.max(logits, axis=-1, keepdims=True)
    shifted = logits - m
    out_ref[...] = shifted - jnp.log(jnp.sum(jnp.exp(shifted), axis=-1,
                                             keepdims=True))


# --------------------------------------------------------------------------- #
# Parameter preparation (padding / fusing / scale-folding) — done once.
# --------------------------------------------------------------------------- #
def _pad_axis(x, axis, mult, value=0.0):
    pad = (-x.shape[axis]) % mult
    if pad == 0:
        return x
    widths = [(0, 0)] * x.ndim
    widths[axis] = (0, pad)
    return jnp.pad(x, widths, constant_values=value)


def prepare_kernel_params(params):
    W = params["W_stack"]          # [9, E, H]
    b = params["b_stack"]          # [9, 1, H]
    W_out = params["W_out"]        # [H, V]
    b_out = params["b_out"]        # [1, V]
    char_emb = params["char_embeddings"]   # [V, E]
    pos_emb = params["position_embeddings"]  # [20, E]

    H = W.shape[2]
    V = W_out.shape[1]
    scale = jnp.float32(1.0 / math.sqrt(H))

    def pad_w(w):   # [E, H] -> [Ep, Hp]
        return _pad_axis(_pad_axis(w, 0, LANE), 1, LANE)

    def pad_b(bi):  # [1, H] -> [1, Hp]
        return _pad_axis(bi, 1, LANE)

    # Fused Q|K|V slabs; the 1/sqrt(H) attention scale is folded into the
    # encoder & cross QUERY weights/biases (decoder self-attention is unscaled
    # in the reference, so its Q is left untouched).
    w_e_qkv = jnp.concatenate(
        [pad_w(W[E_WQ] * scale), pad_w(W[E_WK]), pad_w(W[E_WV])], axis=1)
    b_e_qkv = jnp.concatenate(
        [pad_b(b[E_WQ] * scale), pad_b(b[E_WK]), pad_b(b[E_WV])], axis=1)

    w_d_qkv = jnp.concatenate(
        [pad_w(W[D_WQ]), pad_w(W[D_WK]), pad_w(W[D_WV])], axis=1)
    b_d_qkv = jnp.concatenate(
        [pad_b(b[D_WQ]), pad_b(b[D_WK]), pad_b(b[D_WV])], axis=1)

    w_c_kv = jnp.concatenate([pad_w(W[C_WK]), pad_w(W[C_WV])], axis=1)
    b_c_kv = jnp.concatenate([pad_b(b[C_WK]), pad_b(b[C_WV])], axis=1)
    w_c_q = pad_w(W[C_WQ] * scale)
    b_c_q = pad_b(b[C_WQ] * scale)

    # Output projection: zero-pad rows (hid) and cols (vocab); padded vocab
    # lanes get a hugely negative bias so log_softmax ignores them.
    w_out_p = _pad_axis(_pad_axis(W_out, 0, LANE), 1, LANE)
    b_out_p = _pad_axis(b_out, 1, LANE, value=NEG_BIG)

    return {
        "char_emb": _pad_axis(char_emb, 1, LANE),
        "pos_emb": _pad_axis(pos_emb, 1, LANE),
        "w_e_qkv": w_e_qkv, "b_e_qkv": b_e_qkv,
        "w_d_qkv": w_d_qkv, "b_d_qkv": b_d_qkv,
        "w_c_kv": w_c_kv, "b_c_kv": b_c_kv,
        "w_c_q": w_c_q, "b_c_q": b_c_q,
        "w_out": w_out_p, "b_out": b_out_p,
        "h_pad": ((H + LANE - 1) // LANE) * LANE,
        "vocab": V,
    }


# --------------------------------------------------------------------------- #
# Wrapper
# --------------------------------------------------------------------------- #
def encoder_decoder_forward(enc_ids, dec_ids, kp, *, compute_dtype=jnp.float32):
    """Batched forward. enc_ids/dec_ids: int32 [B, Se] / [B, Sd] (or 1-D for a
    single pair, matching the PyTorch module's signature)."""
    squeeze = (enc_ids.ndim == 1)
    if squeeze:
        enc_ids = enc_ids[None]
        dec_ids = dec_ids[None]
    B, Se = enc_ids.shape
    _, Sd = dec_ids.shape
    assert Se <= 20 and Sd <= 20, "position embedding table holds 20 positions"

    Ep = kp["char_emb"].shape[1]
    Hp = kp["h_pad"]
    Vp = kp["w_out"].shape[1]
    V = kp["vocab"]

    # Embedding + position-embedding gathers stay as JAX glue.
    # TODO(synk): fuse the token-id gather via PrefetchScalarGridSpec + pl.Element.
    enc_x = kp["char_emb"][enc_ids] + kp["pos_emb"][:Se][None]   # [B, Se, Ep]
    dec_x = kp["char_emb"][dec_ids] + kp["pos_emb"][:Sd][None]   # [B, Sd, Ep]

    # Causal additive mask, built once outside the kernel.
    tri = jnp.tril(jnp.ones((Sd, Sd), dtype=jnp.bool_))
    mask = jnp.where(tri, 0.0, -1e9).astype(jnp.float32)

    const2 = lambda b: (0, 0)
    kernel = functools.partial(encoder_decoder_kernel, h_pad=Hp,
                               compute_dtype=compute_dtype)

    out = pl.pallas_call(
        kernel,
        out_shape=jax.ShapeDtypeStruct((B, Sd, Vp), jnp.float32),
        grid=(B,),
        in_specs=[
            pl.BlockSpec((None, Se, Ep), lambda b: (b, 0, 0)),   # enc_x
            pl.BlockSpec((None, Sd, Ep), lambda b: (b, 0, 0)),   # dec_x
            pl.BlockSpec((Ep, 3 * Hp), const2),                  # w_e_qkv
            pl.BlockSpec((1, 3 * Hp), const2),                   # b_e_qkv
            pl.BlockSpec((Ep, 3 * Hp), const2),                  # w_d_qkv
            pl.BlockSpec((1, 3 * Hp), const2),                   # b_d_qkv
            pl.BlockSpec((Ep, 2 * Hp), const2),                  # w_c_kv
            pl.BlockSpec((1, 2 * Hp), const2),                   # b_c_kv
            pl.BlockSpec((Ep, Hp), const2),                      # w_c_q
            pl.BlockSpec((1, Hp), const2),                       # b_c_q
            pl.BlockSpec((Hp, Vp), const2),                      # w_out
            pl.BlockSpec((1, Vp), const2),                       # b_out
            pl.BlockSpec((Sd, Sd), const2),                      # mask
        ],
        out_specs=pl.BlockSpec((None, Sd, Vp), lambda b: (b, 0, 0)),
        compiler_params=pltpu.CompilerParams(
            dimension_semantics=("parallel",)),
    )(enc_x, dec_x,
      kp["w_e_qkv"], kp["b_e_qkv"], kp["w_d_qkv"], kp["b_d_qkv"],
      kp["w_c_kv"], kp["b_c_kv"], kp["w_c_q"], kp["b_c_q"],
      kp["w_out"], kp["b_out"], mask)

    out = out[..., :V]                 # drop padded vocab lanes
    if squeeze:
        out = out[0]
    return out


# --------------------------------------------------------------------------- #
# Plain-JAX reference (mirrors the PyTorch forward exactly) + params
# --------------------------------------------------------------------------- #
def reference_forward(enc_ids, dec_ids, params):
    char_emb = params["char_embeddings"]
    pos_emb = params["position_embeddings"]
    W = params["W_stack"]
    b = params["b_stack"]
    W_out = params["W_out"]
    b_out = params["b_out"]
    H = W.shape[-1]
    se, sd = enc_ids.shape[0], dec_ids.shape[0]

    enc_x = char_emb[enc_ids] + pos_emb[:se]
    dec_x = char_emb[dec_ids] + pos_emb[:sd]
    lin = lambda x, i: x @ W[i] + b[i]

    e_q, e_k, e_v = lin(enc_x, E_WQ), lin(enc_x, E_WK), lin(enc_x, E_WV)
    enc_states = jax.nn.softmax((e_q @ e_k.T) / math.sqrt(H), axis=-1) @ e_v

    d_q, d_k, d_v = lin(dec_x, D_WQ), lin(dec_x, D_WK), lin(dec_x, D_WV)
    s = d_q @ d_k.T
    tri = jnp.tril(jnp.ones((sd, sd)))
    s = jnp.where(tri == 0, -1e9, s)
    dec_states = jax.nn.softmax(s, axis=-1) @ d_v

    c_q = lin(dec_states, C_WQ)
    c_k = lin(enc_states, C_WK)
    c_v = lin(enc_states, C_WV)
    cross = jax.nn.softmax((c_q @ c_k.T) / math.sqrt(H), axis=-1) @ c_v

    final = cross + dec_states
    logits = final @ W_out + b_out
    return jax.nn.log_softmax(logits, axis=-1)


def init_params(key, vocab_len, embed_dim, hid_dim):
    ks = jax.random.split(key, 6)
    char_emb = jax.random.normal(ks[0], (vocab_len, embed_dim), jnp.float32)
    pos_emb = jax.random.normal(ks[1], (20, embed_dim), jnp.float32)
    bound = 1.0 / math.sqrt(embed_dim)
    w_stack = jax.random.uniform(ks[2], (9, embed_dim, hid_dim), jnp.float32,
                                 -bound, bound)
    b_stack = jax.random.uniform(ks[3], (9, 1, hid_dim), jnp.float32,
                                 -bound, bound)
    bound_o = 1.0 / math.sqrt(hid_dim)
    w_out = jax.random.uniform(ks[4], (hid_dim, vocab_len), jnp.float32,
                               -bound_o, bound_o)
    b_out = jax.random.uniform(ks[5], (1, vocab_len), jnp.float32,
                               -bound_o, bound_o)
    return {
        "char_embeddings": char_emb,
        "position_embeddings": pos_emb,
        "W_stack": w_stack,
        "b_stack": b_stack,
        "W_out": w_out,
        "b_out": b_out,
    }


if __name__ == "__main__":
    # embed_dim must equal hid_dim for cross-attention shape consistency
    # (same constraint as the PyTorch module).
    embed_dim = 32
    hid_dim = 32
    vocab_len = 64
    enc_len = 8    # <= 20 (position table size)
    dec_len = 8
    batch = 4      # batched grid over (enc, dec) pairs

    key = jax.random.PRNGKey(0)
    k_param, k_enc, k_dec = jax.random.split(key, 3)
    params = init_params(k_param, vocab_len, embed_dim, hid_dim)
    kparams = prepare_kernel_params(params)

    enc_ids = jax.random.randint(k_enc, (batch, enc_len), 0, vocab_len, jnp.int32)
    dec_ids = jax.random.randint(k_dec, (batch, dec_len), 0, vocab_len, jnp.int32)

    # Batched kernel run.
    out = encoder_decoder_forward(enc_ids, dec_ids, kparams)
    out = jax.block_until_ready(out)
    assert out.shape == (batch, dec_len, vocab_len), out.shape

    # Single-pair path (matches the PyTorch module's un-batched signature).
    out_single = encoder_decoder_forward(enc_ids[0], dec_ids[0], kparams)
    out_single = jax.block_until_ready(out_single)
    assert out_single.shape == (dec_len, vocab_len), out_single.shape

    # Sanity vs. plain-JAX reference (loose tolerance: approx reciprocal in softmax).
    ref = jax.vmap(reference_forward, in_axes=(0, 0, None))(enc_ids, dec_ids, params)
    assert bool(jnp.all(jnp.isfinite(out)))
    assert bool(jnp.allclose(out, ref, atol=5e-2, rtol=5e-2))

    print("KERNEL_OK")
</pallas_src>

<mosaic_0001>
module attributes {stable_mosaic.version = 11 : i64} {
  func.func @encoder_decoder_kernel(%arg0: i32, %arg1: memref<1x8x128xf32, #tpu.memory_space<vmem>>, %arg2: memref<1x8x128xf32, #tpu.memory_space<vmem>>, %arg3: memref<128x384xf32, #tpu.memory_space<vmem>>, %arg4: memref<1x384xf32, #tpu.memory_space<vmem>>, %arg5: memref<128x384xf32, #tpu.memory_space<vmem>>, %arg6: memref<1x384xf32, #tpu.memory_space<vmem>>, %arg7: memref<128x256xf32, #tpu.memory_space<vmem>>, %arg8: memref<1x256xf32, #tpu.memory_space<vmem>>, %arg9: memref<128x128xf32, #tpu.memory_space<vmem>>, %arg10: memref<1x128xf32, #tpu.memory_space<vmem>>, %arg11: memref<128x128xf32, #tpu.memory_space<vmem>>, %arg12: memref<1x128xf32, #tpu.memory_space<vmem>>, %arg13: memref<8x8xf32, #tpu.memory_space<vmem>>, %arg14: memref<1x8x128xf32, #tpu.memory_space<vmem>>) attributes {dimension_semantics = [#tpu.dimension_semantics<parallel>], iteration_bounds = array<i64: 4>, scalar_prefetch = 0 : i64, scratch_operands = 0 : i64, tpu.core_type = #tpu.core_type<tc>, window_params = [{transform_indices = @transform_0, window_bounds = array<i64: 1, 8, 128>}, {transform_indices = @transform_1, window_bounds = array<i64: 1, 8, 128>}, {pipeline_mode = #tpu.pipeline_mode<synchronous>, transform_indices = @transform_2, window_bounds = array<i64: 128, 384>}, {pipeline_mode = #tpu.pipeline_mode<synchronous>, transform_indices = @transform_3, window_bounds = array<i64: 1, 384>}, {pipeline_mode = #tpu.pipeline_mode<synchronous>, transform_indices = @transform_4, window_bounds = array<i64: 128, 384>}, {pipeline_mode = #tpu.pipeline_mode<synchronous>, transform_indices = @transform_5, window_bounds = array<i64: 1, 384>}, {pipeline_mode = #tpu.pipeline_mode<synchronous>, transform_indices = @transform_6, window_bounds = array<i64: 128, 256>}, {pipeline_mode = #tpu.pipeline_mode<synchronous>, transform_indices = @transform_7, window_bounds = array<i64: 1, 256>}, {pipeline_mode = #tpu.pipeline_mode<synchronous>, transform_indices = @transform_8, window_bounds = array<i64: 128, 128>}, {pipeline_mode = #tpu.pipeline_mode<synchronous>, transform_indices = @transform_9, window_bounds = array<i64: 1, 128>}, {pipeline_mode = #tpu.pipeline_mode<synchronous>, transform_indices = @transform_10, window_bounds = array<i64: 128, 128>}, {pipeline_mode = #tpu.pipeline_mode<synchronous>, transform_indices = @transform_11, window_bounds = array<i64: 1, 128>}, {pipeline_mode = #tpu.pipeline_mode<synchronous>, transform_indices = @transform_12, window_bounds = array<i64: 8, 8>}, {transform_indices = @transform_13, window_bounds = array<i64: 1, 8, 128>}]} {
    %c0 = arith.constant 0 : index
    %c0_0 = arith.constant 0 : index
    %c0_1 = arith.constant 0 : index
    %0 = vector.load %arg1[%c0, %c0_0, %c0_1] : memref<1x8x128xf32, #tpu.memory_space<vmem>>, vector<1x8x128xf32>
    %1 = vector.shape_cast %0 : vector<1x8x128xf32> to vector<8x128xf32>
    %c0_2 = arith.constant 0 : index
    %c0_3 = arith.constant 0 : index
    %c0_4 = arith.constant 0 : index
    %2 = vector.load %arg2[%c0_2, %c0_3, %c0_4] : memref<1x8x128xf32, #tpu.memory_space<vmem>>, vector<1x8x128xf32>
    %3 = vector.shape_cast %2 : vector<1x8x128xf32> to vector<8x128xf32>
    %c0_5 = arith.constant 0 : index
    %c0_6 = arith.constant 0 : index
    %4 = vector.load %arg3[%c0_5, %c0_6] : memref<128x384xf32, #tpu.memory_space<vmem>>, vector<128x384xf32>
    %cst = arith.constant dense<0.000000e+00> : vector<8x384xf32>
    %5 = tpu.matmul %1, %4, %cst {dimension_numbers = #tpu.dot_dimension_numbers<[1], [0], [0], [1], [0, 0, 1, 1], [], []>} : vector<8x128xf32>, vector<128x384xf32>, vector<8x384xf32> -> vector<8x384xf32>
    %c0_7 = arith.constant 0 : index
    %c0_8 = arith.constant 0 : index
    %6 = vector.load %arg4[%c0_7, %c0_8] : memref<1x384xf32, #tpu.memory_space<vmem>>, vector<1x384xf32>
    %7 = vector.broadcast %6 : vector<1x384xf32> to vector<8x384xf32>
    %8 = arith.addf %5, %7 : vector<8x384xf32>
    %9 = vector.extract_strided_slice %8 {offsets = [0, 0], sizes = [8, 128], strides = [1, 1]} : vector<8x384xf32> to vector<8x128xf32>
    %10 = vector.extract_strided_slice %8 {offsets = [0, 128], sizes = [8, 128], strides = [1, 1]} : vector<8x384xf32> to vector<8x128xf32>
    %11 = vector.extract_strided_slice %8 {offsets = [0, 256], sizes = [8, 128], strides = [1, 1]} : vector<8x384xf32> to vector<8x128xf32>
    %cst_9 = arith.constant dense<0.000000e+00> : vector<8x8xf32>
    %12 = tpu.matmul %9, %10, %cst_9 {dimension_numbers = #tpu.dot_dimension_numbers<[1], [1], [0], [0], [0, 0, 1, 0], [], []>} : vector<8x128xf32>, vector<8x128xf32>, vector<8x8xf32> -> vector<8x8xf32>
    %cst_10 = arith.constant dense<0xFF800000> : vector<8xf32>
    %13 = vector.multi_reduction <maximumf>, %12, %cst_10 [1] : vector<8x8xf32> to vector<8xf32>
    %14 = vector.shape_cast %13 : vector<8xf32> to vector<8x1xf32>
    %15 = vector.broadcast %14 : vector<8x1xf32> to vector<8x8xf32>
    %16 = arith.subf %12, %15 : vector<8x8xf32>
    %17 = math.exp %16 : vector<8x8xf32>
    %cst_11 = arith.constant dense<0.000000e+00> : vector<8xf32>
    %18 = vector.multi_reduction <add>, %17, %cst_11 [1] : vector<8x8xf32> to vector<8xf32>
    %19 = vector.shape_cast %18 : vector<8xf32> to vector<8x1xf32>
    %20 = tpu.reciprocal %19 {approx = true} : vector<8x1xf32> -> vector<8x1xf32>
    %21 = vector.broadcast %20 : vector<8x1xf32> to vector<8x8xf32>
    %22 = arith.mulf %17, %21 : vector<8x8xf32>
    %cst_12 = arith.constant dense<0.000000e+00> : vector<8x128xf32>
    %23 = tpu.matmul %22, %11, %cst_12 {dimension_numbers = #tpu.dot_dimension_numbers<[1], [0], [0], [1], [0, 0, 1, 1], [], []>} : vector<8x8xf32>, vector<8x128xf32>, vector<8x128xf32> -> vector<8x128xf32>
    %c0_13 = arith.constant 0 : index
    %c0_14 = arith.constant 0 : index
    %24 = vector.load %arg5[%c0_13, %c0_14] : memref<128x384xf32, #tpu.memory_space<vmem>>, vector<128x384xf32>
    %cst_15 = arith.constant dense<0.000000e+00> : vector<8x384xf32>
    %25 = tpu.matmul %3, %24, %cst_15 {dimension_numbers = #tpu.dot_dimension_numbers<[1], [0], [0], [1], [0, 0, 1, 1], [], []>} : vector<8x128xf32>, vector<128x384xf32>, vector<8x384xf32> -> vector<8x384xf32>
    %c0_16 = arith.constant 0 : index
    %c0_17 = arith.constant 0 : index
    %26 = vector.load %arg6[%c0_16, %c0_17] : memref<1x384xf32, #tpu.memory_space<vmem>>, vector<1x384xf32>
    %27 = vector.broadcast %26 : vector<1x384xf32> to vector<8x384xf32>
    %28 = arith.addf %25, %27 : vector<8x384xf32>
    %29 = vector.extract_strided_slice %28 {offsets = [0, 0], sizes = [8, 128], strides = [1, 1]} : vector<8x384xf32> to vector<8x128xf32>
    %30 = vector.extract_strided_slice %28 {offsets = [0, 128], sizes = [8, 128], strides = [1, 1]} : vector<8x384xf32> to vector<8x128xf32>
    %31 = vector.extract_strided_slice %28 {offsets = [0, 256], sizes = [8, 128], strides = [1, 1]} : vector<8x384xf32> to vector<8x128xf32>
    %cst_18 = arith.constant dense<0.000000e+00> : vector<8x8xf32>
    %32 = tpu.matmul %29, %30, %cst_18 {dimension_numbers = #tpu.dot_dimension_numbers<[1], [1], [0], [0], [0, 0, 1, 0], [], []>} : vector<8x128xf32>, vector<8x128xf32>, vector<8x8xf32> -> vector<8x8xf32>
    %c0_19 = arith.constant 0 : index
    %c0_20 = arith.constant 0 : index
    %33 = vector.load %arg13[%c0_19, %c0_20] : memref<8x8xf32, #tpu.memory_space<vmem>>, vector<8x8xf32>
    %34 = arith.addf %32, %33 : vector<8x8xf32>
    %cst_21 = arith.constant dense<0xFF800000> : vector<8xf32>
    %35 = vector.multi_reduction <maximumf>, %34, %cst_21 [1] : vector<8x8xf32> to vector<8xf32>
    %36 = vector.shape_cast %35 : vector<8xf32> to vector<8x1xf32>
    %37 = vector.broadcast %36 : vector<8x1xf32> to vector<8x8xf32>
    %38 = arith.subf %34, %37 : vector<8x8xf32>
    %39 = math.exp %38 : vector<8x8xf32>
    %cst_22 = arith.constant dense<0.000000e+00> : vector<8xf32>
    %40 = vector.multi_reduction <add>, %39, %cst_22 [1] : vector<8x8xf32> to vector<8xf32>
    %41 = vector.shape_cast %40 : vector<8xf32> to vector<8x1xf32>
    %42 = tpu.reciprocal %41 {approx = true} : vector<8x1xf32> -> vector<8x1xf32>
    %43 = vector.broadcast %42 : vector<8x1xf32> to vector<8x8xf32>
    %44 = arith.mulf %39, %43 : vector<8x8xf32>
    %cst_23 = arith.constant dense<0.000000e+00> : vector<8x128xf32>
    %45 = tpu.matmul %44, %31, %cst_23 {dimension_numbers = #tpu.dot_dimension_numbers<[1], [0], [0], [1], [0, 0, 1, 1], [], []>} : vector<8x8xf32>, vector<8x128xf32>, vector<8x128xf32> -> vector<8x128xf32>
    %c0_24 = arith.constant 0 : index
    %c0_25 = arith.constant 0 : index
    %46 = vector.load %arg9[%c0_24, %c0_25] : memref<128x128xf32, #tpu.memory_space<vmem>>, vector<128x128xf32>
    %cst_26 = arith.constant dense<0.000000e+00> : vector<8x128xf32>
    %47 = tpu.matmul %45, %46, %cst_26 {dimension_numbers = #tpu.dot_dimension_numbers<[1], [0], [0], [1], [0, 0, 1, 1], [], []>} : vector<8x128xf32>, vector<128x128xf32>, vector<8x128xf32> -> vector<8x128xf32>
    %c0_27 = arith.constant 0 : index
    %c0_28 = arith.constant 0 : index
    %48 = vector.load %arg10[%c0_27, %c0_28] : memref<1x128xf32, #tpu.memory_space<vmem>>, vector<1x128xf32>
    %49 = vector.broadcast %48 : vector<1x128xf32> to vector<8x128xf32>
    %50 = arith.addf %47, %49 : vector<8x128xf32>
    %c0_29 = arith.constant 0 : index
    %c0_30 = arith.constant 0 : index
    %51 = vector.load %arg7[%c0_29, %c0_30] : memref<128x256xf32, #tpu.memory_space<vmem>>, vector<128x256xf32>
    %cst_31 = arith.constant dense<0.000000e+00> : vector<8x256xf32>
    %52 = tpu.matmul %23, %51, %cst_31 {dimension_numbers = #tpu.dot_dimension_numbers<[1], [0], [0], [1], [0, 0, 1, 1], [], []>} : vector<8x128xf32>, vector<128x256xf32>, vector<8x256xf32> -> vector<8x256xf32>
    %c0_32 = arith.constant 0 : index
    %c0_33 = arith.constant 0 : index
    %53 = vector.load %arg8[%c0_32, %c0_33] : memref<1x256xf32, #tpu.memory_space<vmem>>, vector<1x256xf32>
    %54 = vector.broadcast %53 : vector<1x256xf32> to vector<8x256xf32>
    %55 = arith.addf %52, %54 : vector<8x256xf32>
    %56 = vector.extract_strided_slice %55 {offsets = [0, 0], sizes = [8, 128], strides = [1, 1]} : vector<8x256xf32> to vector<8x128xf32>
    %57 = vector.extract_strided_slice %55 {offsets = [0, 128], sizes = [8, 128], strides = [1, 1]} : vector<8x256xf32> to vector<8x128xf32>
    %cst_34 = arith.constant dense<0.000000e+00> : vector<8x8xf32>
    %58 = tpu.matmul %50, %56, %cst_34 {dimension_numbers = #tpu.dot_dimension_numbers<[1], [1], [0], [0], [0, 0, 1, 0], [], []>} : vector<8x128xf32>, vector<8x128xf32>, vector<8x8xf32> -> vector<8x8xf32>
    %cst_35 = arith.constant dense<0xFF800000> : vector<8xf32>
    %59 = vector.multi_reduction <maximumf>, %58, %cst_35 [1] : vector<8x8xf32> to vector<8xf32>
    %60 = vector.shape_cast %59 : vector<8xf32> to vector<8x1xf32>
    %61 = vector.broadcast %60 : vector<8x1xf32> to vector<8x8xf32>
    %62 = arith.subf %58, %61 : vector<8x8xf32>
    %63 = math.exp %62 : vector<8x8xf32>
    %cst_36 = arith.constant dense<0.000000e+00> : vector<8xf32>
    %64 = vector.multi_reduction <add>, %63, %cst_36 [1] : vector<8x8xf32> to vector<8xf32>
    %65 = vector.shape_cast %64 : vector<8xf32> to vector<8x1xf32>
    %66 = tpu.reciprocal %65 {approx = true} : vector<8x1xf32> -> vector<8x1xf32>
    %67 = vector.broadcast %66 : vector<8x1xf32> to vector<8x8xf32>
    %68 = arith.mulf %63, %67 : vector<8x8xf32>
    %cst_37 = arith.constant dense<0.000000e+00> : vector<8x128xf32>
    %69 = tpu.matmul %68, %57, %cst_37 {dimension_numbers = #tpu.dot_dimension_numbers<[1], [0], [0], [1], [0, 0, 1, 1], [], []>} : vector<8x8xf32>, vector<8x128xf32>, vector<8x128xf32> -> vector<8x128xf32>
    %70 = arith.addf %69, %45 : vector<8x128xf32>
    %c0_38 = arith.constant 0 : index
    %c0_39 = arith.constant 0 : index
    %71 = vector.load %arg11[%c0_38, %c0_39] : memref<128x128xf32, #tpu.memory_space<vmem>>, vector<128x128xf32>
    %cst_40 = arith.constant dense<0.000000e+00> : vector<8x128xf32>
    %72 = tpu.matmul %70, %71, %cst_40 {dimension_numbers = #tpu.dot_dimension_numbers<[1], [0], [0], [1], [0, 0, 1, 1], [], []>} : vector<8x128xf32>, vector<128x128xf32>, vector<8x128xf32> -> vector<8x128xf32>
    %c0_41 = arith.constant 0 : index
    %c0_42 = arith.constant 0 : index
    %73 = vector.load %arg12[%c0_41, %c0_42] : memref<1x128xf32, #tpu.memory_space<vmem>>, vector<1x128xf32>
    %74 = vector.broadcast %73 : vector<1x128xf32> to vector<8x128xf32>
    %75 = arith.addf %72, %74 : vector<8x128xf32>
    %cst_43 = arith.constant dense<0xFF800000> : vector<8xf32>
    %76 = vector.multi_reduction <maximumf>, %75, %cst_43 [1] : vector<8x128xf32> to vector<8xf32>
    %77 = vector.shape_cast %76 : vector<8xf32> to vector<8x1xf32>
    %78 = vector.broadcast %77 : vector<8x1xf32> to vector<8x128xf32>
    %79 = arith.subf %75, %78 : vector<8x128xf32>
    %80 = math.exp %79 : vector<8x128xf32>
    %cst_44 = arith.constant dense<0.000000e+00> : vector<8xf32>
    %81 = vector.multi_reduction <add>, %80, %cst_44 [1] : vector<8x128xf32> to vector<8xf32>
    %82 = vector.shape_cast %81 : vector<8xf32> to vector<8x1xf32>
    %83 = math.log %82 : vector<8x1xf32>
    %84 = vector.broadcast %83 : vector<8x1xf32> to vector<8x128xf32>
    %85 = arith.subf %79, %84 : vector<8x128xf32>
    %c0_45 = arith.constant 0 : index
    %c0_46 = arith.constant 0 : index
    %c0_47 = arith.constant 0 : index
    %86 = vector.load %arg14[%c0_45, %c0_46, %c0_47] : memref<1x8x128xf32, #tpu.memory_space<vmem>>, vector<1x8x128xf32>
    %87 = vector.shape_cast %86 : vector<1x8x128xf32> to vector<8x128xf32>
    %88 = vector.shape_cast %85 : vector<8x128xf32> to vector<1x8x128xf32>
    tpu.vector_store %arg14[%c0_45, %c0_46, %c0_47], %88 {strides = array<i32>} : memref<1x8x128xf32, #tpu.memory_space<vmem>>, vector<1x8x128xf32>,
    return
  }
  func.func @transform_0(%arg0: i32) -> (i32, i32, i32) {
    %c0_i32 = arith.constant 0 : i32
    %c0_i32_0 = arith.constant 0 : i32
    %c0_i32_1 = arith.constant 0 : i32
    return %arg0, %c0_i32, %c0_i32_0 : i32, i32, i32
  }
  func.func @transform_1(%arg0: i32) -> (i32, i32, i32) {
    %c0_i32 = arith.constant 0 : i32
    %c0_i32_0 = arith.constant 0 : i32
    %c0_i32_1 = arith.constant 0 : i32
    return %arg0, %c0_i32, %c0_i32_0 : i32, i32, i32
  }
  func.func @transform_2(%arg0: i32) -> (i32, i32) {
    %c0_i32 = arith.constant 0 : i32
    %c0_i32_0 = arith.constant 0 : i32
    %c0_i32_1 = arith.constant 0 : i32
    return %c0_i32, %c0_i32_0 : i32, i32
  }
  func.func @transform_3(%arg0: i32) -> (i32, i32) {
    %c0_i32 = arith.constant 0 : i32
    %c0_i32_0 = arith.constant 0 : i32
    %c0_i32_1 = arith.constant 0 : i32
    return %c0_i32, %c0_i32_0 : i32, i32
  }
  func.func @transform_4(%arg0: i32) -> (i32, i32) {
    %c0_i32 = arith.constant 0 : i32
    %c0_i32_0 = arith.constant 0 : i32
    %c0_i32_1 = arith.constant 0 : i32
    return %c0_i32, %c0_i32_0 : i32, i32
  }
  func.func @transform_5(%arg0: i32) -> (i32, i32) {
    %c0_i32 = arith.constant 0 : i32
    %c0_i32_0 = arith.constant 0 : i32
    %c0_i32_1 = arith.constant 0 : i32
    return %c0_i32, %c0_i32_0 : i32, i32
  }
  func.func @transform_6(%arg0: i32) -> (i32, i32) {
    %c0_i32 = arith.constant 0 : i32
    %c0_i32_0 = arith.constant 0 : i32
    %c0_i32_1 = arith.constant 0 : i32
    return %c0_i32, %c0_i32_0 : i32, i32
  }
  func.func @transform_7(%arg0: i32) -> (i32, i32) {
    %c0_i32 = arith.constant 0 : i32
    %c0_i32_0 = arith.constant 0 : i32
    %c0_i32_1 = arith.constant 0 : i32
    return %c0_i32, %c0_i32_0 : i32, i32
  }
  func.func @transform_8(%arg0: i32) -> (i32, i32) {
    %c0_i32 = arith.constant 0 : i32
    %c0_i32_0 = arith.constant 0 : i32
    %c0_i32_1 = arith.constant 0 : i32
    return %c0_i32, %c0_i32_0 : i32, i32
  }
  func.func @transform_9(%arg0: i32) -> (i32, i32) {
    %c0_i32 = arith.constant 0 : i32
    %c0_i32_0 = arith.constant 0 : i32
    %c0_i32_1 = arith.constant 0 : i32
    return %c0_i32, %c0_i32_0 : i32, i32
  }
  func.func @transform_10(%arg0: i32) -> (i32, i32) {
    %c0_i32 = arith.constant 0 : i32
    %c0_i32_0 = arith.constant 0 : i32
    %c0_i32_1 = arith.constant 0 : i32
    return %c0_i32, %c0_i32_0 : i32, i32
  }
  func.func @transform_11(%arg0: i32) -> (i32, i32) {
    %c0_i32 = arith.constant 0 : i32
    %c0_i32_0 = arith.constant 0 : i32
    %c0_i32_1 = arith.constant 0 : i32
    return %c0_i32, %c0_i32_0 : i32, i32
  }
  func.func @transform_12(%arg0: i32) -> (i32, i32) {
    %c0_i32 = arith.constant 0 : i32
    %c0_i32_0 = arith.constant 0 : i32
    %c0_i32_1 = arith.constant 0 : i32
    return %c0_i32, %c0_i32_0 : i32, i32
  }
  func.func @transform_13(%arg0: i32) -> (i32, i32, i32) {
    %c0_i32 = arith.constant 0 : i32
    %c0_i32_0 = arith.constant 0 : i32
    %c0_i32_1 = arith.constant 0 : i32
    return %arg0, %c0_i32, %c0_i32_0 : i32, i32, i32
  }
}

</mosaic_0001>

<llo_original>
// kernel: tpu_custom_call.1
$region0: #{tpu_custom_call.1}
  #allocation0 [shape = 'u32[]', space=smem, size = 0x4, offset = 0x4, fixed_abs, tag = 'smem constant byte address 0x4 - core index']
  #allocation1 [shape = 'u32[144,128]{1,0:T(1,128)}', space=vmem, size = 0x12000, scoped, tag = 'internal scratch']
  %s0 = inlined_call_operand.hbm [shape: f32[4,8,128], index: 0, kind: input, shape index: {}]
  %s1 = inlined_call_operand.hbm [shape: f32[4,8,128], index: 1, kind: input, shape index: {}]
  %s2 = inlined_call_operand.hbm [shape: f32[128,384], index: 2, kind: input, shape index: {}]
  %s3 = inlined_call_operand.vmem [shape: f32[1,384], index: 3, kind: input, shape index: {}]
  %s4 = inlined_call_operand.hbm [shape: f32[128,384], index: 4, kind: input, shape index: {}]
  %s5 = inlined_call_operand.vmem [shape: f32[1,384], index: 5, kind: input, shape index: {}]
  %s6 = inlined_call_operand.hbm [shape: f32[128,256], index: 6, kind: input, shape index: {}]
  %s7 = inlined_call_operand.vmem [shape: f32[1,256], index: 7, kind: input, shape index: {}]
  %s8 = inlined_call_operand.hbm [shape: f32[128,128], index: 8, kind: input, shape index: {}]
  %s9 = inlined_call_operand.vmem [shape: f32[1,128], index: 9, kind: input, shape index: {}]
  %s10 = inlined_call_operand.hbm [shape: f32[128,128], index: 10, kind: input, shape index: {}]
  %s11 = inlined_call_operand.vmem [shape: f32[1,128], index: 11, kind: input, shape index: {}]
  %s12 = inlined_call_operand.vmem [shape: f32[8,8], index: 12, kind: input, shape index: {}]
  %s13 = inlined_call_operand.hbm [shape: f32[4,8,128], index: 13, kind: output, shape index: {}]
  %s14 = sld [smem:[#allocation0]]
  $region113: #{tpu_custom_call.1} parent=0
    _
  %s16 = ssub.s32 1, %s14
  %s17 = scalar_select 0, %s16, %s14
  $region1: #{tpu_custom_call.1} parent=0
    #allocation2 [shape = 'u8[8192]{0}', space=vmem, size = 0x2000, scoped, tag = 'input window, operand 0']
    #allocation3 [shape = 's32[2]{0}', space=sflag, size = 0x8, scoped, tag = 'scoped memory for tpu_custom_call.1']
    #allocation4 [shape = 's32[2]{0}', space=sflag, size = 0x8, scoped, tag = 'scoped memory for tpu_custom_call.1']
    #allocation5 [shape = 'u8[8192]{0}', space=vmem, size = 0x2000, scoped, tag = 'input window, operand 1']
    #allocation6 [shape = 's32[2]{0}', space=sflag, size = 0x8, scoped, tag = 'scoped memory for tpu_custom_call.1']
    #allocation7 [shape = 'u8[196608]{0}', space=vmem, size = 0x30000, scoped, tag = 'input window, operand 2, single buffered']
    #allocation8 [shape = 'u8[196608]{0}', space=vmem, size = 0x30000, scoped, tag = 'input window, operand 4, single buffered']
    #allocation9 [shape = 's32[1]{0}', space=sflag, size = 0x4, scoped, tag = 'scoped memory for tpu_custom_call.1']
    #allocation10 [shape = 'u8[131072]{0}', space=vmem, size = 0x20000, scoped, tag = 'input window, operand 6, single buffered']
    #allocation11 [shape = 'u8[65536]{0}', space=vmem, size = 0x10000, scoped, tag = 'input window, operand 8, single buffered']
    #allocation12 [shape = 's32[1]{0}', space=sflag, size = 0x4, scoped, tag = 'scoped memory for tpu_custom_call.1']
    #allocation13 [shape = 'u8[65536]{0}', space=vmem, size = 0x10000, scoped, tag = 'input window, operand 10, single buffered']
    #allocation14 [shape = 'u8[8192]{0}', space=vmem, size = 0x2000, scoped, tag = 'output window, operand 0']
    %18 = vsyncpa [#allocation3], 0
    %s19 = scalar_lea.sflag [#allocation3], 1
    %20 = vsyncpa %s19, 0
    %21 = vsyncpa [#allocation6], 0
    %s22 = scalar_lea.sflag [#allocation6], 1
    %23 = vsyncpa %s22, 0
    %24 = vsyncpa [#allocation9], 0
    %25 = vsyncpa [#allocation12], 0
    %26 = vsyncpa [#allocation4], 0
    %s27 = scalar_lea.sflag [#allocation4], 1
    %28 = vsyncpa %s27, 0
    loop: start=0, step=1, limit=6
    $region2: #{tpu_custom_call.1} parent=1 // loop_pre_header
      _
    $region3: #{tpu_custom_call.1} parent=1 // loop_header
      %s30 = sphi 0, %s34
      %p31 = scmp.ge.s32.totalorder %s30, 6
      %s40 = sphi 0, %s42
      %s43 = sphi 0, %s40
      %s44 = sphi 0, %s43
      %s60 = sphi 0, %s44
      %s66 = sphi 0, %s68
      %s69 = sphi 0, %s66
      %s70 = sphi 0, %s69
      %s86 = sphi 0, %s70
      %s90 = sphi 0, %s90
      %s92 = sphi 0, %s90
      %s93 = sphi 0, %s92
      %s107 = sphi 0, %s93
      %s111 = sphi 0, %s111
      %s113 = sphi 0, %s111
      %s114 = sphi 0, %s113
      %s128 = sphi 0, %s114
      %s132 = sphi 0, %s132
      %s134 = sphi 0, %s132
      %s135 = sphi 0, %s134
      %s149 = sphi 0, %s135
      %s153 = sphi 0, %s153
      %s155 = sphi 0, %s153
      %s156 = sphi 0, %s155
      %s170 = sphi 0, %s156
      %s174 = sphi 0, %s174
      %s176 = sphi 0, %s174
      %s177 = sphi 0, %s176
      %s191 = sphi 0, %s177
      %s195 = sphi 0, %s195
      %s197 = sphi 0, %s195
      %s198 = sphi 0, %s197
      %s212 = sphi 0, %s198
      %s216 = sphi 0, %s216
      %s218 = sphi 0, %s216
      %s219 = sphi 0, %s218
      %s233 = sphi 0, %s219
      %s237 = sphi 0, %s237
      %s239 = sphi 0, %s237
      %s240 = sphi 0, %s239
      %s254 = sphi 0, %s240
      %s258 = sphi 0, %s258
      %s260 = sphi 0, %s258
      %s261 = sphi 0, %s260
      %s275 = sphi 0, %s261
      %s279 = sphi 0, %s279
      %s281 = sphi 0, %s279
      %s282 = sphi 0, %s281
      %s296 = sphi 0, %s282
      %s300 = sphi 0, %s300
      %s302 = sphi 0, %s300
      %s303 = sphi 0, %s302
      %s317 = sphi 0, %s303
      %s323 = sphi 0, %s325
      %s326 = sphi 0, %s323
      %s327 = sphi 0, %s326
      %s343 = sphi 0, %s327
    $region4: #{tpu_custom_call.1} parent=1 // loop_header_branch
      %33 = sbr.rel (%p31) target = $region8
    $region5: #{tpu_custom_call.1} parent=1 // loop_body
      %s35 = ssub.s32 %s30, 1
      %s36 = ssub.s32 %s30, 2
      %s37 = sadd.s32 %s30, 1
      %s38 = ssub.s32 %s30, %s37
      %p39 = scmp.eq.s32.totalorder %s38, 0
      %s41 = sadd.s32 %s40, 1
      %s42 = scalar_select %p39, %s40, %s41
      %p45 = pneg %p39
      %p46 = scmp.eq.s32.totalorder %s30, 3
      %p47 = por %p45, %p46
      %p48 = scmp.ne.s32.totalorder %s40, %s43
      %p49 = scmp.eq.s32.totalorder %s30, 0
      %p50 = por %p48, %p49
      %p51 = scmp.ne.s32.totalorder %s40, %s43
      %p52 = scmp.eq.s32.totalorder %s35, 3
      %p53 = por %p51, %p52
      %p54 = scmp.ne.s32.totalorder %s43, %s44
      %p55 = scmp.eq.s32.totalorder %s35, 0
      %p56 = por %p54, %p55
      %p57 = scmp.ne.s32.totalorder %s43, %s44
      %p58 = scmp.eq.s32.totalorder %s36, 3
      %p59 = por %p57, %p58
      %p61 = scmp.ne.s32.totalorder %s44, %s60
      %p62 = scmp.eq.s32.totalorder %s36, 0
      %p63 = por %p61, %p62
      %s64 = ssub.s32 %s30, %s37
      %p65 = scmp.eq.s32.totalorder %s64, 0
      %s67 = sadd.s32 %s66, 1
      %s68 = scalar_select %p65, %s66, %s67
      %p71 = pneg %p65
      %p72 = scmp.eq.s32.totalorder %s30, 3
      %p73 = por %p71, %p72
      %p74 = scmp.ne.s32.totalorder %s66, %s69
      %p75 = scmp.eq.s32.totalorder %s30, 0
      %p76 = por %p74, %p75
      %p77 = scmp.ne.s32.totalorder %s66, %s69
      %p78 = scmp.eq.s32.totalorder %s35, 3
      %p79 = por %p77, %p78
      %p80 = scmp.ne.s32.totalorder %s69, %s70
      %p81 = scmp.eq.s32.totalorder %s35, 0
      %p82 = por %p80, %p81
      %p83 = scmp.ne.s32.totalorder %s69, %s70
      %p84 = scmp.eq.s32.totalorder %s36, 3
      %p85 = por %p83, %p84
      %p87 = scmp.ne.s32.totalorder %s70, %s86
      %p88 = scmp.eq.s32.totalorder %s36, 0
      %p89 = por %p87, %p88
      %s91 = sadd.s32 %s90, 1
      %p94 = scmp.eq.s32.totalorder %s30, 3
      %p95 = scmp.ne.s32.totalorder %s90, %s92
      %p96 = scmp.eq.s32.totalorder %s30, 0
      %p97 = por %p95, %p96
      %p98 = scmp.ne.s32.totalorder %s90, %s92
      %p99 = scmp.eq.s32.totalorder %s35, 3
      %p100 = por %p98, %p99
      %p101 = scmp.ne.s32.totalorder %s92, %s93
      %p102 = scmp.eq.s32.totalorder %s35, 0
      %p103 = por %p101, %p102
      %p104 = scmp.ne.s32.totalorder %s92, %s93
      %p105 = scmp.eq.s32.totalorder %s36, 3
      %p106 = por %p104, %p105
      %p108 = scmp.ne.s32.totalorder %s93, %s107
      %p109 = scmp.eq.s32.totalorder %s36, 0
      %p110 = por %p108, %p109
      %s112 = sadd.s32 %s111, 1
      %p115 = scmp.eq.s32.totalorder %s30, 3
      %p116 = scmp.ne.s32.totalorder %s111, %s113
      %p117 = scmp.eq.s32.totalorder %s30, 0
      %p118 = por %p116, %p117
      %p119 = scmp.ne.s32.totalorder %s111, %s113
      %p120 = scmp.eq.s32.totalorder %s35, 3
      %p121 = por %p119, %p120
      %p122 = scmp.ne.s32.totalorder %s113, %s114
      %p123 = scmp.eq.s32.totalorder %s35, 0
      %p124 = por %p122, %p123
      %p125 = scmp.ne.s32.totalorder %s113, %s114
      %p126 = scmp.eq.s32.totalorder %s36, 3
      %p127 = por %p125, %p126
      %p129 = scmp.ne.s32.totalorder %s114, %s128
      %p130 = scmp.eq.s32.totalorder %s36, 0
      %p131 = por %p129, %p130
      %s133 = sadd.s32 %s132, 1
      %p136 = scmp.eq.s32.totalorder %s30, 3
      %p137 = scmp.ne.s32.totalorder %s132, %s134
      %p138 = scmp.eq.s32.totalorder %s30, 0
      %p139 = por %p137, %p138
      %p140 = scmp.ne.s32.totalorder %s132, %s134
      %p141 = scmp.eq.s32.totalorder %s35, 3
      %p142 = por %p140, %p141
      %p143 = scmp.ne.s32.totalorder %s134, %s135
      %p144 = scmp.eq.s32.totalorder %s35, 0
      %p145 = por %p143, %p144
      %p146 = scmp.ne.s32.totalorder %s134, %s135
      %p147 = scmp.eq.s32.totalorder %s36, 3
      %p148 = por %p146, %p147
      %p150 = scmp.ne.s32.totalorder %s135, %s149
      %p151 = scmp.eq.s32.totalorder %s36, 0
      %p152 = por %p150, %p151
      %s154 = sadd.s32 %s153, 1
      %p157 = scmp.eq.s32.totalorder %s30, 3
      %p158 = scmp.ne.s32.totalorder %s153, %s155
      %p159 = scmp.eq.s32.totalorder %s30, 0
      %p160 = por %p158, %p159
      %p161 = scmp.ne.s32.totalorder %s153, %s155
      %p162 = scmp.eq.s32.totalorder %s35, 3
      %p163 = por %p161, %p162
      %p164 = scmp.ne.s32.totalorder %s155, %s156
      %p165 = scmp.eq.s32.totalorder %s35, 0
      %p166 = por %p164, %p165
      %p167 = scmp.ne.s32.totalorder %s155, %s156
      %p168 = scmp.eq.s32.totalorder %s36, 3
      %p169 = por %p167, %p168
      %p171 = scmp.ne.s32.totalorder %s156, %s170
      %p172 = scmp.eq.s32.totalorder %s36, 0
      %p173 = por %p171, %p172
      %s175 = sadd.s32 %s174, 1
      %p178 = scmp.eq.s32.totalorder %s30, 3
      %p179 = scmp.ne.s32.totalorder %s174, %s176
      %p180 = scmp.eq.s32.totalorder %s30, 0
      %p181 = por %p179, %p180
      %p182 = scmp.ne.s32.totalorder %s174, %s176
      %p183 = scmp.eq.s32.totalorder %s35, 3
      %p184 = por %p182, %p183
      %p185 = scmp.ne.s32.totalorder %s176, %s177
      %p186 = scmp.eq.s32.totalorder %s35, 0
      %p187 = por %p185, %p186
      %p188 = scmp.ne.s32.totalorder %s176, %s177
      %p189 = scmp.eq.s32.totalorder %s36, 3
      %p190 = por %p188, %p189
      %p192 = scmp.ne.s32.totalorder %s177, %s191
      %p193 = scmp.eq.s32.totalorder %s36, 0
      %p194 = por %p192, %p193
      %s196 = sadd.s32 %s195, 1
      %p199 = scmp.eq.s32.totalorder %s30, 3
      %p200 = scmp.ne.s32.totalorder %s195, %s197
      %p201 = scmp.eq.s32.totalorder %s30, 0
      %p202 = por %p200, %p201
      %p203 = scmp.ne.s32.totalorder %s195, %s197
      %p204 = scmp.eq.s32.totalorder %s35, 3
      %p205 = por %p203, %p204
      %p206 = scmp.ne.s32.totalorder %s197, %s198
      %p207 = scmp.eq.s32.totalorder %s35, 0
      %p208 = por %p206, %p207
      %p209 = scmp.ne.s32.totalorder %s197, %s198
      %p210 = scmp.eq.s32.totalorder %s36, 3
      %p211 = por %p209, %p210
      %p213 = scmp.ne.s32.totalorder %s198, %s212
      %p214 = scmp.eq.s32.totalorder %s36, 0
      %p215 = por %p213, %p214
      %s217 = sadd.s32 %s216, 1
      %p220 = scmp.eq.s32.totalorder %s30, 3
      %p221 = scmp.ne.s32.totalorder %s216, %s218
      %p222 = scmp.eq.s32.totalorder %s30, 0
      %p223 = por %p221, %p222
      %p224 = scmp.ne.s32.totalorder %s216, %s218
      %p225 = scmp.eq.s32.totalorder %s35, 3
      %p226 = por %p224, %p225
      %p227 = scmp.ne.s32.totalorder %s218, %s219
      %p228 = scmp.eq.s32.totalorder %s35, 0
      %p229 = por %p227, %p228
      %p230 = scmp.ne.s32.totalorder %s218, %s219
      %p231 = scmp.eq.s32.totalorder %s36, 3
      %p232 = por %p230, %p231
      %p234 = scmp.ne.s32.totalorder %s219, %s233
      %p235 = scmp.eq.s32.totalorder %s36, 0
      %p236 = por %p234, %p235
      %s238 = sadd.s32 %s237, 1
      %p241 = scmp.eq.s32.totalorder %s30, 3
      %p242 = scmp.ne.s32.totalorder %s237, %s239
      %p243 = scmp.eq.s32.totalorder %s30, 0
      %p244 = por %p242, %p243
      %p245 = scmp.ne.s32.totalorder %s237, %s239
      %p246 = scmp.eq.s32.totalorder %s35, 3
      %p247 = por %p245, %p246
      %p248 = scmp.ne.s32.totalorder %s239, %s240
      %p249 = scmp.eq.s32.totalorder %s35, 0
      %p250 = por %p248, %p249
      %p251 = scmp.ne.s32.totalorder %s239, %s240
      %p252 = scmp.eq.s32.totalorder %s36, 3
      %p253 = por %p251, %p252
      %p255 = scmp.ne.s32.totalorder %s240, %s254
      %p256 = scmp.eq.s32.totalorder %s36, 0
      %p257 = por %p255, %p256
      %s259 = sadd.s32 %s258, 1
      %p262 = scmp.eq.s32.totalorder %s30, 3
      %p263 = scmp.ne.s32.totalorder %s258, %s260
      %p264 = scmp.eq.s32.totalorder %s30, 0
      %p265 = por %p263, %p264
      %p266 = scmp.ne.s32.totalorder %s258, %s260
      %p267 = scmp.eq.s32.totalorder %s35, 3
      %p268 = por %p266, %p267
      %p269 = scmp.ne.s32.totalorder %s260, %s261
      %p270 = scmp.eq.s32.totalorder %s35, 0
      %p271 = por %p269, %p270
      %p272 = scmp.ne.s32.totalorder %s260, %s261
      %p273 = scmp.eq.s32.totalorder %s36, 3
      %p274 = por %p272, %p273
      %p276 = scmp.ne.s32.totalorder %s261, %s275
      %p277 = scmp.eq.s32.totalorder %s36, 0
      %p278 = por %p276, %p277
      %s280 = sadd.s32 %s279, 1
      %p283 = scmp.eq.s32.totalorder %s30, 3
      %p284 = scmp.ne.s32.totalorder %s279, %s281
      %p285 = scmp.eq.s32.totalorder %s30, 0
      %p286 = por %p284, %p285
      %p287 = scmp.ne.s32.totalorder %s279, %s281
      %p288 = scmp.eq.s32.totalorder %s35, 3
      %p289 = por %p287, %p288
      %p290 = scmp.ne.s32.totalorder %s281, %s282
      %p291 = scmp.eq.s32.totalorder %s35, 0
      %p292 = por %p290, %p291
      %p293 = scmp.ne.s32.totalorder %s281, %s282
      %p294 = scmp.eq.s32.totalorder %s36, 3
      %p295 = por %p293, %p294
      %p297 = scmp.ne.s32.totalorder %s282, %s296
      %p298 = scmp.eq.s32.totalorder %s36, 0
      %p299 = por %p297, %p298
      %s301 = sadd.s32 %s300, 1
      %p304 = scmp.eq.s32.totalorder %s30, 3
      %p305 = scmp.ne.s32.totalorder %s300, %s302
      %p306 = scmp.eq.s32.totalorder %s30, 0
      %p307 = por %p305, %p306
      %p308 = scmp.ne.s32.totalorder %s300, %s302
      %p309 = scmp.eq.s32.totalorder %s35, 3
      %p310 = por %p308, %p309
      %p311 = scmp.ne.s32.totalorder %s302, %s303
      %p312 = scmp.eq.s32.totalorder %s35, 0
      %p313 = por %p311, %p312
      %p314 = scmp.ne.s32.totalorder %s302, %s303
      %p315 = scmp.eq.s32.totalorder %s36, 3
      %p316 = por %p314, %p315
      %p318 = scmp.ne.s32.totalorder %s303, %s317
      %p319 = scmp.eq.s32.totalorder %s36, 0
      %p320 = por %p318, %p319
      %s321 = ssub.s32 %s30, %s37
      %p322 = scmp.eq.s32.totalorder %s321, 0
      %s324 = sadd.s32 %s323, 1
      %s325 = scalar_select %p322, %s323, %s324
      %p328 = pneg %p322
      %p329 = scmp.eq.s32.totalorder %s30, 3
      %p330 = por %p328, %p329
      %p331 = scmp.ne.s32.totalorder %s323, %s326
      %p332 = scmp.eq.s32.totalorder %s30, 0
      %p333 = por %p331, %p332
      %p334 = scmp.ne.s32.totalorder %s323, %s326
      %p335 = scmp.eq.s32.totalorder %s35, 3
      %p336 = por %p334, %p335
      %p337 = scmp.ne.s32.totalorder %s326, %s327
      %p338 = scmp.eq.s32.totalorder %s35, 0
      %p339 = por %p337, %p338
      %p340 = scmp.ne.s32.totalorder %s326, %s327
      %p341 = scmp.eq.s32.totalorder %s36, 3
      %p342 = por %p340, %p341
      %p344 = scmp.ne.s32.totalorder %s327, %s343
      %p345 = scmp.eq.s32.totalorder %s36, 0
      %p346 = por %p344, %p345
      %p347 = scmp.le.s32.totalorder 1, %s30
      %p348 = scmp.lt.s32.totalorder %s30, 5
      %p349 = pnand %p347, %p348
      %p350 = pneg %p349
      // Predicated region
      $region9: #{tpu_custom_call.1} parent=5 // pred_check
        _
      $region10: #{tpu_custom_call.1} parent=5 // pred_check_branch
        %352 = sbr.rel (%p349) target = $region12
      $region11: #{tpu_custom_call.1} parent=5 // pred_region
        %s353 = ssub.s32 %s30, 1
        // Predicated region
        $region13: #{tpu_custom_call.1} parent=11 // pred_check
          %p354 = pneg %p103
        $region14: #{tpu_custom_call.1} parent=11 // pred_check_branch
          %356 = sbr.rel (%p354) target = $region16
        $region15: #{tpu_custom_call.1} parent=11 // pred_region
          %s358 = ssub.s32 6144, 6144
          %359 = vsyncadd [#allocation6], %s358
          %s360 = sshll.u32 [#allocation7], 4
          %s361 = int_to_ptr.vmem [resolvable:$true] %s360
          %366 = dma.hbm_to_vmem [thread:$0]  %s2, 6144, %s361, [#allocation6], 384, 384, 24
        $region16: #{tpu_custom_call.1} parent=11 // pred_fallthru
          _
        // Predicated region
        $region17: #{tpu_custom_call.1} parent=11 // pred_check
          %p367 = pneg %p124
        $region18: #{tpu_custom_call.1} parent=11 // pred_check_branch
          %369 = sbr.rel (%p367) target = $region20
        $region19: #{tpu_custom_call.1} parent=11 // pred_region
          _
        $region20: #{tpu_custom_call.1} parent=11 // pred_fallthru
          _
        // Predicated region
        $region21: #{tpu_custom_call.1} parent=11 // pred_check
          %p370 = pneg %p145
        $region22: #{tpu_custom_call.1} parent=11 // pred_check_branch
          %372 = sbr.rel (%p370) target = $region24
        $region23: #{tpu_custom_call.1} parent=11 // pred_region
          %s374 = ssub.s32 6144, 6144
          %375 = vsyncadd [#allocation9], %s374
          %s376 = sshll.u32 [#allocation8], 4
          %s377 = int_to_ptr.vmem [resolvable:$true] %s376
          %382 = dma.hbm_to_vmem [thread:$0]  %s4, 6144, %s377, [#allocation9], 384, 384, 24
        $region24: #{tpu_custom_call.1} parent=11 // pred_fallthru
          _
        // Predicated region
        $region25: #{tpu_custom_call.1} parent=11 // pred_check
          %p383 = pneg %p166
        $region26: #{tpu_custom_call.1} parent=11 // pred_check_branch
          %385 = sbr.rel (%p383) target = $region28
        $region27: #{tpu_custom_call.1} parent=11 // pred_region
          _
        $region28: #{tpu_custom_call.1} parent=11 // pred_fallthru
          _
        // Predicated region
        $region29: #{tpu_custom_call.1} parent=11 // pred_check
          %p386 = pneg %p187
        $region30: #{tpu_custom_call.1} parent=11 // pred_check_branch
          %388 = sbr.rel (%p386) target = $region32
        $region31: #{tpu_custom_call.1} parent=11 // pred_region
          %s390 = ssub.s32 4096, 4096
          %391 = vsyncadd [#allocation9], %s390
          %s392 = sshll.u32 [#allocation10], 4
          %s393 = int_to_ptr.vmem [resolvable:$true] %s392
          %398 = dma.hbm_to_vmem [thread:$0]  %s6, 4096, %s393, [#allocation9], 256, 256, 16
        $region32: #{tpu_custom_call.1} parent=11 // pred_fallthru
          _
        // Predicated region
        $region33: #{tpu_custom_call.1} parent=11 // pred_check
          %p399 = pneg %p208
        $region34: #{tpu_custom_call.1} parent=11 // pred_check_branch
          %401 = sbr.rel (%p399) target = $region36
        $region35: #{tpu_custom_call.1} parent=11 // pred_region
          _
        $region36: #{tpu_custom_call.1} parent=11 // pred_fallthru
          _
        // Predicated region
        $region37: #{tpu_custom_call.1} parent=11 // pred_check
          %p402 = pneg %p229
        $region38: #{tpu_custom_call.1} parent=11 // pred_check_branch
          %404 = sbr.rel (%p402) target = $region40
        $region39: #{tpu_custom_call.1} parent=11 // pred_region
          %s406 = ssub.s32 2048, 2048
          %407 = vsyncadd [#allocation12], %s406
          %s408 = sshll.u32 [#allocation11], 4
          %s409 = int_to_ptr.vmem [resolvable:$true] %s408
          %414 = dma.hbm_to_vmem [thread:$0]  %s8, 2048, %s409, [#allocation12], 128, 128, 8
        $region40: #{tpu_custom_call.1} parent=11 // pred_fallthru
          _
        // Predicated region
        $region41: #{tpu_custom_call.1} parent=11 // pred_check
          %p415 = pneg %p250
        $region42: #{tpu_custom_call.1} parent=11 // pred_check_branch
          %417 = sbr.rel (%p415) target = $region44
        $region43: #{tpu_custom_call.1} parent=11 // pred_region
          _
        $region44: #{tpu_custom_call.1} parent=11 // pred_fallthru
          _
        // Predicated region
        $region45: #{tpu_custom_call.1} parent=11 // pred_check
          %p418 = pneg %p271
        $region46: #{tpu_custom_call.1} parent=11 // pred_check_branch
          %420 = sbr.rel (%p418) target = $region48
        $region47: #{tpu_custom_call.1} parent=11 // pred_region
          %s422 = ssub.s32 2048, 2048
          %423 = vsyncadd [#allocation12], %s422
          %s424 = sshll.u32 [#allocation13], 4
          %s425 = int_to_ptr.vmem [resolvable:$true] %s424
          %430 = dma.hbm_to_vmem [thread:$0]  %s10, 2048, %s425, [#allocation12], 128, 128, 8
        $region48: #{tpu_custom_call.1} parent=11 // pred_fallthru
          _
        // Predicated region
        $region49: #{tpu_custom_call.1} parent=11 // pred_check
          %p431 = pneg %p292
        $region50: #{tpu_custom_call.1} parent=11 // pred_check_branch
          %433 = sbr.rel (%p431) target = $region52
        $region51: #{tpu_custom_call.1} parent=11 // pred_region
          _
        $region52: #{tpu_custom_call.1} parent=11 // pred_fallthru
          _
        // Predicated region
        $region53: #{tpu_custom_call.1} parent=11 // pred_check
          %p434 = pneg %p313
        $region54: #{tpu_custom_call.1} parent=11 // pred_check_branch
          %436 = sbr.rel (%p434) target = $region56
        $region55: #{tpu_custom_call.1} parent=11 // pred_region
          _
        $region56: #{tpu_custom_call.1} parent=11 // pred_fallthru
          _
      $region12: #{tpu_custom_call.1} parent=5 // pred_fallthru
        _
      %p437 = scmp.lt.s32.totalorder %s30, 4
      // Predicated region
      $region57: #{tpu_custom_call.1} parent=5 // pred_check
        %p438 = pneg %p437
      $region58: #{tpu_custom_call.1} parent=5 // pred_check_branch
        %440 = sbr.rel (%p438) target = $region60
      $region59: #{tpu_custom_call.1} parent=5 // pred_region
        // Predicated region
        $region61: #{tpu_custom_call.1} parent=59 // pred_check
          %p441 = pneg %p50
        $region62: #{tpu_custom_call.1} parent=59 // pred_check_branch
          %443 = sbr.rel (%p441) target = $region64
        $region63: #{tpu_custom_call.1} parent=59 // pred_region
          %s444 = sand.u32 %s40, 1
          %s445 = scalar_lea.sflag [#allocation3], %s444
          %s446 = sand.u32 %s40, 1
          %s447 = smul.addr %s446, 8
          %s448 = scalar_lea.vmem [#allocation2], %s447
          %s450 = ssub.s32 128, 128
          %451 = vsyncadd %s445, %s450
          %s452 = smul.addr %s30, 128
          %s453 = scalar_lea.hbm %s0, %s452
          %s455 = sshll.u32 %s448, 4
          %s456 = int_to_ptr.vmem [resolvable:$true] %s455
          %458 = dma.hbm_to_vmem [thread:$0]  %s453, 128, %s456, %s445
        $region64: #{tpu_custom_call.1} parent=59 // pred_fallthru
          _
        // Predicated region
        $region65: #{tpu_custom_call.1} parent=59 // pred_check
          %p459 = pneg %p76
        $region66: #{tpu_custom_call.1} parent=59 // pred_check_branch
          %461 = sbr.rel (%p459) target = $region68
        $region67: #{tpu_custom_call.1} parent=59 // pred_region
          %s462 = sand.u32 %s30, 1
          %s463 = scalar_lea.sflag [#allocation6], %s462
          %s464 = sand.u32 %s66, 1
          %s465 = smul.addr %s464, 8
          %s466 = scalar_lea.vmem [#allocation5], %s465
          %s468 = ssub.s32 128, 128
          %469 = vsyncadd %s463, %s468
          %s470 = smul.addr %s30, 128
          %s471 = scalar_lea.hbm %s1, %s470
          %s473 = sshll.u32 %s466, 4
          %s474 = int_to_ptr.vmem [resolvable:$true] %s473
          %476 = dma.hbm_to_vmem [thread:$0]  %s471, 128, %s474, %s463
        $region68: #{tpu_custom_call.1} parent=59 // pred_fallthru
          _
      $region60: #{tpu_custom_call.1} parent=5 // pred_fallthru
        _
      %p477 = scmp.le.s32.totalorder 1, %s30
      %p478 = scmp.lt.s32.totalorder %s30, 5
      %p479 = pnand %p477, %p478
      %p480 = pneg %p479
      // Predicated region
      $region69: #{tpu_custom_call.1} parent=5 // pred_check
        _
      $region70: #{tpu_custom_call.1} parent=5 // pred_check_branch
        %482 = sbr.rel (%p479) target = $region72
      $region71: #{tpu_custom_call.1} parent=5 // pred_region
        %s483 = ssub.s32 %s30, 1
        %s484 = sand.u32 %s43, 1
        %s485 = scalar_lea.sflag [#allocation3], %s484
        %s486 = sand.u32 %s43, 1
        %s487 = smul.addr %s486, 8
        %s488 = scalar_lea.vmem [#allocation2], %s487
        // Predicated region
        $region73: #{tpu_custom_call.1} parent=71 // pred_check
          %p489 = pneg %p56
        $region74: #{tpu_custom_call.1} parent=71 // pred_check_branch
          %491 = sbr.rel (%p489) target = $region76
        $region75: #{tpu_custom_call.1} parent=71 // pred_region
          %492 = dma.done %s485, 128
        $region76: #{tpu_custom_call.1} parent=71 // pred_fallthru
          _
        %s493 = sand.u32 %s35, 1
        %s494 = scalar_lea.sflag [#allocation6], %s493
        %s495 = sand.u32 %s69, 1
        %s496 = smul.addr %s495, 8
        %s497 = scalar_lea.vmem [#allocation5], %s496
        // Predicated region
        $region77: #{tpu_custom_call.1} parent=71 // pred_check
          %p498 = pneg %p82
        $region78: #{tpu_custom_call.1} parent=71 // pred_check_branch
          %500 = sbr.rel (%p498) target = $region80
        $region79: #{tpu_custom_call.1} parent=71 // pred_region
          %501 = dma.done %s494, 128
        $region80: #{tpu_custom_call.1} parent=71 // pred_fallthru
          _
        // Predicated region
        $region81: #{tpu_custom_call.1} parent=71 // pred_check
          %p502 = pneg %p103
        $region82: #{tpu_custom_call.1} parent=71 // pred_check_branch
          %504 = sbr.rel (%p502) target = $region84
        $region83: #{tpu_custom_call.1} parent=71 // pred_region
          %505 = dma.done [#allocation6], 6144
        $region84: #{tpu_custom_call.1} parent=71 // pred_fallthru
          _
        // Predicated region
        $region85: #{tpu_custom_call.1} parent=71 // pred_check
          %p506 = pneg %p145
        $region86: #{tpu_custom_call.1} parent=71 // pred_check_branch
          %508 = sbr.rel (%p506) target = $region88
        $region87: #{tpu_custom_call.1} parent=71 // pred_region
          %509 = dma.done [#allocation9], 6144
        $region88: #{tpu_custom_call.1} parent=71 // pred_fallthru
          _
        // Predicated region
        $region89: #{tpu_custom_call.1} parent=71 // pred_check
          %p510 = pneg %p187
        $region90: #{tpu_custom_call.1} parent=71 // pred_check_branch
          %512 = sbr.rel (%p510) target = $region92
        $region91: #{tpu_custom_call.1} parent=71 // pred_region
          %513 = dma.done [#allocation9], 4096
        $region92: #{tpu_custom_call.1} parent=71 // pred_fallthru
          _
        // Predicated region
        $region93: #{tpu_custom_call.1} parent=71 // pred_check
          %p514 = pneg %p229
        $region94: #{tpu_custom_call.1} parent=71 // pred_check_branch
          %516 = sbr.rel (%p514) target = $region96
        $region95: #{tpu_custom_call.1} parent=71 // pred_region
          %517 = dma.done [#allocation12], 2048
        $region96: #{tpu_custom_call.1} parent=71 // pred_fallthru
          _
        // Predicated region
        $region97: #{tpu_custom_call.1} parent=71 // pred_check
          %p518 = pneg %p271
        $region98: #{tpu_custom_call.1} parent=71 // pred_check_branch
          %520 = sbr.rel (%p518) target = $region100
        $region99: #{tpu_custom_call.1} parent=71 // pred_region
          %521 = dma.done [#allocation12], 2048
        $region100: #{tpu_custom_call.1} parent=71 // pred_fallthru
          _
        %s522 = sand.u32 %s43, 1
        %s523 = scalar_lea.sflag [#allocation3], %s522
        %s524 = sand.u32 %s43, 1
        %s525 = smul.addr %s524, 8
        %s526 = scalar_lea.vmem [#allocation2], %s525
        %p527 = pneg %p56
        %p528 = pneg %p53
        %s529 = sand.u32 %s35, 1
        %s530 = scalar_lea.sflag [#allocation6], %s529
        %s531 = sand.u32 %s69, 1
        %s532 = smul.addr %s531, 8
        %s533 = scalar_lea.vmem [#allocation5], %s532
        %p534 = pneg %p82
        %p535 = pneg %p79
        %p536 = pneg %p103
        %p537 = pneg %p100
        %p538 = pneg %p124
        %p539 = pneg %p121
        %p540 = pneg %p145
        %p541 = pneg %p142
        %p542 = pneg %p166
        %p543 = pneg %p163
        %p544 = pneg %p187
        %p545 = pneg %p184
        %p546 = pneg %p208
        %p547 = pneg %p205
        %p548 = pneg %p229
        %p549 = pneg %p226
        %p550 = pneg %p250
        %p551 = pneg %p247
        %p552 = pneg %p271
        %p553 = pneg %p268
        %p554 = pneg %p292
        %p555 = pneg %p289
        %p556 = pneg %p313
        %p557 = pneg %p310
        %p558 = pneg %p339
        %p559 = pneg %p336
        %s560 = sand.u32 %s326, 1
        %s561 = scalar_lea.sflag [#allocation4], %s560
        %s562 = sand.u32 %s326, 1
        %s563 = smul.addr %s562, 8
        %s564 = scalar_lea.vmem [#allocation14], %s563
        %v565 = vld [vmem:[%s488] sm:$0xff]
        %v566 = vld [vmem:[%s497] sm:$0xff]
        %v567 = vld [vmem:[#allocation7] sm:$0xff]
        %v568 = vld [vmem:[#allocation7 + $0x8] sm:$0xff]
        %v569 = vld [vmem:[#allocation7 + $0x10] sm:$0xff]
        %v570 = vld [vmem:[#allocation7 + $0x18] sm:$0xff]
        %v571 = vld [vmem:[#allocation7 + $0x20] sm:$0xff]
        %v572 = vld [vmem:[#allocation7 + $0x28] sm:$0xff]
        %v573 = vld [vmem:[#allocation7 + $0x30] sm:$0xff]
        %v574 = vld [vmem:[#allocation7 + $0x38] sm:$0xff]
        %v575 = vld [vmem:[#allocation7 + $0x40] sm:$0xff]
        %v576 = vld [vmem:[#allocation7 + $0x48] sm:$0xff]
        %v577 = vld [vmem:[#allocation7 + $0x50] sm:$0xff]
        %v578 = vld [vmem:[#allocation7 + $0x58] sm:$0xff]
        %v579 = vld [vmem:[#allocation7 + $0x60] sm:$0xff]
        %v580 = vld [vmem:[#allocation7 + $0x68] sm:$0xff]
        %v581 = vld [vmem:[#allocation7 + $0x70] sm:$0xff]
        %v582 = vld [vmem:[#allocation7 + $0x78] sm:$0xff]
        %v583 = vld [vmem:[#allocation7 + $0x80] sm:$0xff]
        %v584 = vld [vmem:[#allocation7 + $0x88] sm:$0xff]
        %v585 = vld [vmem:[#allocation7 + $0x90] sm:$0xff]
        %v586 = vld [vmem:[#allocation7 + $0x98] sm:$0xff]
        %v587 = vld [vmem:[#allocation7 + $0xa0] sm:$0xff]
        %v588 = vld [vmem:[#allocation7 + $0xa8] sm:$0xff]
        %v589 = vld [vmem:[#allocation7 + $0xb0] sm:$0xff]
        %v590 = vld [vmem:[#allocation7 + $0xb8] sm:$0xff]
        %v591 = vld [vmem:[#allocation7 + $0xc0] sm:$0xff]
        %v592 = vld [vmem:[#allocation7 + $0xc8] sm:$0xff]
        %v593 = vld [vmem:[#allocation7 + $0xd0] sm:$0xff]
        %v594 = vld [vmem:[#allocation7 + $0xd8] sm:$0xff]
        %v595 = vld [vmem:[#allocation7 + $0xe0] sm:$0xff]
        %v596 = vld [vmem:[#allocation7 + $0xe8] sm:$0xff]
        %v597 = vld [vmem:[#allocation7 + $0xf0] sm:$0xff]
        %v598 = vld [vmem:[#allocation7 + $0xf8] sm:$0xff]
        %v599 = vld [vmem:[#allocation7 + $0x100] sm:$0xff]
        %v600 = vld [vmem:[#allocation7 + $0x108] sm:$0xff]
        %v601 = vld [vmem:[#allocation7 + $0x110] sm:$0xff]
        %v602 = vld [vmem:[#allocation7 + $0x118] sm:$0xff]
        %v603 = vld [vmem:[#allocation7 + $0x120] sm:$0xff]
        %v604 = vld [vmem:[#allocation7 + $0x128] sm:$0xff]
        %v605 = vld [vmem:[#allocation7 + $0x130] sm:$0xff]
        %v606 = vld [vmem:[#allocation7 + $0x138] sm:$0xff]
        %v607 = vld [vmem:[#allocation7 + $0x140] sm:$0xff]
        %v608 = vld [vmem:[#allocation7 + $0x148] sm:$0xff]
        %v609 = vld [vmem:[#allocation7 + $0x150] sm:$0xff]
        %v610 = vld [vmem:[#allocation7 + $0x158] sm:$0xff]
        %v611 = vld [vmem:[#allocation7 + $0x160] sm:$0xff]
        %v612 = vld [vmem:[#allocation7 + $0x168] sm:$0xff]
        %v613 = vld [vmem:[#allocation7 + $0x170] sm:$0xff]
        %v614 = vld [vmem:[#allocation7 + $0x178] sm:$0xff]
        %v615 = vld [vmem:[%s3] sm:$0x7]
        %v617 = vlaneseq
        %v618 = vshrl.u32 %v617, 7
        %v619 = vsub.s32 0, %v618
        %v620 = vrot.slane %v615, %v619
        %v621 = vlaneseq
        %v622 = vshrl.u32 %v621, 7
        %v623 = vsub.s32 1, %v622
        %v624 = vrot.slane %v615, %v623
        %v625 = vlaneseq
        %v626 = vshrl.u32 %v625, 7
        %v627 = vsub.s32 2, %v626
        %v628 = vrot.slane %v615, %v627
        %632 = vmatprep.subr.mxu0 %v568
        %633 = vmatpush1.msra.mxu0 %v567
        %634 = vmatprep.subr.mxu0 %v571
        %635 = vmatpush1.msra.mxu0 %v570
        %636 = vmatprep.subr.mxu0 %v574
        %637 = vmatpush1.msra.mxu0 %v573
        %638 = vmatprep.subr.mxu0 %v577
        %639 = vmatpush1.msra.mxu0 %v576
        %640 = vmatprep.subr.mxu0 %v580
        %641 = vmatpush1.msra.mxu0 %v579
        %642 = vmatprep.subr.mxu0 %v583
        %643 = vmatpush1.msra.mxu0 %v582
        %644 = vmatprep.subr.mxu0 %v586
        %645 = vmatpush1.msra.mxu0 %v585
        %646 = vmatprep.subr.mxu0 %v589
        %647 = vmatpush1.msra.mxu0 %v588
        %648 = vmatprep.subr.mxu0 %v592
        %649 = vmatpush1.msra.mxu0 %v591
        %650 = vmatprep.subr.mxu0 %v595
        %651 = vmatpush1.msra.mxu0 %v594
        %652 = vmatprep.subr.mxu0 %v598
        %653 = vmatpush1.msra.mxu0 %v597
        %654 = vmatprep.subr.mxu0 %v601
        %655 = vmatpush1.msra.mxu0 %v600
        %656 = vmatprep.subr.mxu0 %v604
        %657 = vmatpush1.msra.mxu0 %v603
        %658 = vmatprep.subr.mxu0 %v607
        %659 = vmatpush1.msra.mxu0 %v606
        %660 = vmatprep.subr.mxu0 %v610
        %661 = vmatpush1.msra.mxu0 %v609
        %662 = vmatprep.subr.mxu0 %v613
        %663 = vmatpush1.msra.mxu0 %v612
        %664 = vmatprep.subr.mxu0 0.0
        %665 = vmatpush1.msra.mxu0 0.0
        %666 = vmatprep.subr.mxu0 0.0
        %667 = vmatpush1.msra.mxu0 0.0
        %668 = vmatprep.subr.mxu0 0.0
        %669 = vmatpush1.msra.mxu0 0.0
        %670 = vmatprep.subr.mxu0 0.0
        %671 = vmatpush1.msra.mxu0 0.0
        %672 = vmatprep.subr.mxu0 0.0
        %673 = vmatpush1.msra.mxu0 0.0
        %674 = vmatprep.subr.mxu0 0.0
        %675 = vmatpush1.msra.mxu0 0.0
        %676 = vmatprep.subr.mxu0 0.0
        %677 = vmatpush1.msra.mxu0 0.0
        %678 = vmatprep.subr.mxu0 0.0
        %679 = vmatpush1.msra.mxu0 0.0
        %680 = vmatprep.subr.mxu0 0.0
        %681 = vmatpush1.msra.mxu0 0.0
        %682 = vmatprep.subr.mxu0 0.0
        %683 = vmatpush1.msra.mxu0 0.0
        %684 = vmatprep.subr.mxu0 0.0
        %685 = vmatpush1.msra.mxu0 0.0
        %686 = vmatprep.subr.mxu0 0.0
        %687 = vmatpush1.msra.mxu0 0.0
        %688 = vmatprep.subr.mxu0 0.0
        %689 = vmatpush1.msra.mxu0 0.0
        %690 = vmatprep.subr.mxu0 0.0
        %691 = vmatpush1.msra.mxu0 0.0
        %692 = vmatprep.subr.mxu0 0.0
        %693 = vmatpush1.msra.mxu0 0.0
        %694 = vmatprep.subr.mxu0 0.0
        %695 = vmatpush1.msra.mxu0 0.0
        %696 = vmatprep.mubr.f32.mxu0 0.0
        %697 = vmatmul.mubr.f32.gmra.mrb[0].mxu0 %v565
        %v698 = vpop.f32.mrb[0].mxu0
        %v699 = vadd.f32 %v620, %v698
        %v700 = vpop.f32.mrb[0].mxu0
        %v701 = vadd.f32 %v624, %v700
        %702 = vdwg.mxu0
        %703 = vmatprep.subr.mxu0 0.0
        %704 = vmatpush1.msra.mxu0 %v569
        %705 = vmatprep.subr.mxu0 0.0
        %706 = vmatpush1.msra.mxu0 %v572
        %707 = vmatprep.subr.mxu0 0.0
        %708 = vmatpush1.msra.mxu0 %v575
        %709 = vmatprep.subr.mxu0 0.0
        %710 = vmatpush1.msra.mxu0 %v578
        %711 = vmatprep.subr.mxu0 0.0
        %712 = vmatpush1.msra.mxu0 %v581
        %713 = vmatprep.subr.mxu0 0.0
        %714 = vmatpush1.msra.mxu0 %v584
        %715 = vmatprep.subr.mxu0 0.0
        %716 = vmatpush1.msra.mxu0 %v587
        %717 = vmatprep.subr.mxu0 0.0
        %718 = vmatpush1.msra.mxu0 %v590
        %719 = vmatprep.subr.mxu0 0.0
        %720 = vmatpush1.msra.mxu0 %v593
        %721 = vmatprep.subr.mxu0 0.0
        %722 = vmatpush1.msra.mxu0 %v596
        %723 = vmatprep.subr.mxu0 0.0
        %724 = vmatpush1.msra.mxu0 %v599
        %725 = vmatprep.subr.mxu0 0.0
        %726 = vmatpush1.msra.mxu0 %v602
        %727 = vmatprep.subr.mxu0 0.0
        %728 = vmatpush1.msra.mxu0 %v605
        %729 = vmatprep.subr.mxu0 0.0
        %730 = vmatpush1.msra.mxu0 %v608
        %731 = vmatprep.subr.mxu0 0.0
        %732 = vmatpush1.msra.mxu0 %v611
        %733 = vmatprep.subr.mxu0 0.0
        %734 = vmatpush1.msra.mxu0 %v614
        %735 = vmatprep.subr.mxu0 0.0
        %736 = vmatpush1.msra.mxu0 0.0
        %737 = vmatprep.subr.mxu0 0.0
        %738 = vmatpush1.msra.mxu0 0.0
        %739 = vmatprep.subr.mxu0 0.0
        %740 = vmatpush1.msra.mxu0 0.0
        %741 = vmatprep.subr.mxu0 0.0
        %742 = vmatpush1.msra.mxu0 0.0
        %743 = vmatprep.subr.mxu0 0.0
        %744 = vmatpush1.msra.mxu0 0.0
        %745 = vmatprep.subr.mxu0 0.0
        %746 = vmatpush1.msra.mxu0 0.0
        %747 = vmatprep.subr.mxu0 0.0
        %748 = vmatpush1.msra.mxu0 0.0
        %749 = vmatprep.subr.mxu0 0.0
        %750 = vmatpush1.msra.mxu0 0.0
        %751 = vmatprep.subr.mxu0 0.0
        %752 = vmatpush1.msra.mxu0 0.0
        %753 = vmatprep.subr.mxu0 0.0
        %754 = vmatpush1.msra.mxu0 0.0
        %755 = vmatprep.subr.mxu0 0.0
        %756 = vmatpush1.msra.mxu0 0.0
        %757 = vmatprep.subr.mxu0 0.0
        %758 = vmatpush1.msra.mxu0 0.0
        %759 = vmatprep.subr.mxu0 0.0
        %760 = vmatpush1.msra.mxu0 0.0
        %761 = vmatprep.subr.mxu0 0.0
        %762 = vmatpush1.msra.mxu0 0.0
        %763 = vmatprep.subr.mxu0 0.0
        %764 = vmatpush1.msra.mxu0 0.0
        %765 = vmatprep.subr.mxu0 0.0
        %766 = vmatpush1.msra.mxu0 0.0
        %767 = vmatprep.mubr.f32.mxu0 0.0
        %768 = vmatmul.mubr.f32.gmra.mrb[0].mxu0 %v565
        %v769 = vpop.f32.mrb[0].mxu0
        %v770 = vadd.f32 %v628, %v769
        %v771 = vpop.f32.mrb[0].mxu0
        %772 = vdwg.mxu0
        %773 = vmatprep.subr.mxu0 0.0
        %774 = vmatpush1.xpose.msra.mxu0 %v701
        %775 = vmatprep.subr.mxu0 0.0
        %776 = vmatpush1.xpose.msra.mxu0 0.0
        %777 = vmatprep.subr.mxu0 0.0
        %778 = vmatpush1.xpose.msra.mxu0 0.0
        %779 = vmatprep.subr.mxu0 0.0
        %780 = vmatpush1.xpose.msra.mxu0 0.0
        %781 = vmatprep.subr.mxu0 0.0
        %782 = vmatpush1.xpose.msra.mxu0 0.0
        %783 = vmatprep.subr.mxu0 0.0
        %784 = vmatpush1.xpose.msra.mxu0 0.0
        %785 = vmatprep.subr.mxu0 0.0
        %786 = vmatpush1.xpose.msra.mxu0 0.0
        %787 = vmatprep.subr.mxu0 0.0
        %788 = vmatpush1.xpose.msra.mxu0 0.0
        %789 = vmatprep.subr.mxu0 0.0
        %790 = vmatpush1.xpose.msra.mxu0 0.0
        %791 = vmatprep.subr.mxu0 0.0
        %792 = vmatpush1.xpose.msra.mxu0 0.0
        %793 = vmatprep.subr.mxu0 0.0
        %794 = vmatpush1.xpose.msra.mxu0 0.0
        %795 = vmatprep.subr.mxu0 0.0
        %796 = vmatpush1.xpose.msra.mxu0 0.0
        %797 = vmatprep.subr.mxu0 0.0
        %798 = vmatpush1.xpose.msra.mxu0 0.0
        %799 = vmatprep.subr.mxu0 0.0
        %800 = vmatpush1.xpose.msra.mxu0 0.0
        %801 = vmatprep.subr.mxu0 0.0
        %802 = vmatpush1.xpose.msra.mxu0 0.0
        %803 = vmatprep.subr.mxu0 0.0
        %804 = vmatpush1.xpose.msra.mxu0 0.0
        %805 = vmatprep.subr.mxu0 0.0
        %806 = vmatpush1.xpose.msra.mxu0 0.0
        %807 = vmatprep.subr.mxu0 0.0
        %808 = vmatpush1.xpose.msra.mxu0 0.0
        %809 = vmatprep.subr.mxu0 0.0
        %810 = vmatpush1.xpose.msra.mxu0 0.0
        %811 = vmatprep.subr.mxu0 0.0
        %812 = vmatpush1.xpose.msra.mxu0 0.0
        %813 = vmatprep.subr.mxu0 0.0
        %814 = vmatpush1.xpose.msra.mxu0 0.0
        %815 = vmatprep.subr.mxu0 0.0
        %816 = vmatpush1.xpose.msra.mxu0 0.0
        %817 = vmatprep.subr.mxu0 0.0
        %818 = vmatpush1.xpose.msra.mxu0 0.0
        %819 = vmatprep.subr.mxu0 0.0
        %820 = vmatpush1.xpose.msra.mxu0 0.0
        %821 = vmatprep.subr.mxu0 0.0
        %822 = vmatpush1.xpose.msra.mxu0 0.0
        %823 = vmatprep.subr.mxu0 0.0
        %824 = vmatpush1.xpose.msra.mxu0 0.0
        %825 = vmatprep.subr.mxu0 0.0
        %826 = vmatpush1.xpose.msra.mxu0 0.0
        %827 = vmatprep.subr.mxu0 0.0
        %828 = vmatpush1.xpose.msra.mxu0 0.0
        %829 = vmatprep.subr.mxu0 0.0
        %830 = vmatpush1.xpose.msra.mxu0 0.0
        %831 = vmatprep.subr.mxu0 0.0
        %832 = vmatpush1.xpose.msra.mxu0 0.0
        %833 = vmatprep.subr.mxu0 0.0
        %834 = vmatpush1.xpose.msra.mxu0 0.0
        %835 = vmatprep.subr.mxu0 0.0
        %836 = vmatpush1.xpose.msra.mxu0 0.0
        %837 = vmatprep.mubr.f32.mxu0 0.0
        %838 = vmatmul.mubr.f32.gmra.mrb[0].mxu0 %v699
        %v839 = vpop.f32.mrb[0].mxu0
        %v840 = vadd.f32 0.0, %v839
        %v841 = vpop.f32.mrb[0].mxu0
        %842 = vdwg.mxu0
        %vm843 = vcmask 64512
        %v844 = vsel %vm843, %v840, -inf
        %845 = vmax.xlane.f32.xlu0 %v844
        %v846 = vpop.xlane.xlu0 %845
        %v847 = vsub.f32 %v840, %v846
        %v848 = vmul.f32 %v847, 1.442695
        %v849 = vpow.pop %v848
        %v850 = vsel %vm843, %v849, 0.0
        %851 = vadd.xlane.f32.xlu0 %v850
        %v852 = vpop.xlane.xlu0 %851
        %v853 = vrcp.pop %v852
        %v854 = vmul.f32 %v849, %v853
        %v856 = vsel %vm843, %v854, 0
        %858 = vmatprep.subr.mxu0 0.0
        %859 = vmatpush1.msra.mxu0 %v770
        %860 = vmatprep.subr.mxu0 0.0
        %861 = vmatpush1.msra.mxu0 0.0
        %862 = vmatprep.subr.mxu0 0.0
        %863 = vmatpush1.msra.mxu0 0.0
        %864 = vmatprep.subr.mxu0 0.0
        %865 = vmatpush1.msra.mxu0 0.0
        %866 = vmatprep.subr.mxu0 0.0
        %867 = vmatpush1.msra.mxu0 0.0
        %868 = vmatprep.subr.mxu0 0.0
        %869 = vmatpush1.msra.mxu0 0.0
        %870 = vmatprep.subr.mxu0 0.0
        %871 = vmatpush1.msra.mxu0 0.0
        %872 = vmatprep.subr.mxu0 0.0
        %873 = vmatpush1.msra.mxu0 0.0
        %874 = vmatprep.subr.mxu0 0.0
        %875 = vmatpush1.msra.mxu0 0.0
        %876 = vmatprep.subr.mxu0 0.0
        %877 = vmatpush1.msra.mxu0 0.0
        %878 = vmatprep.subr.mxu0 0.0
        %879 = vmatpush1.msra.mxu0 0.0
        %880 = vmatprep.subr.mxu0 0.0
        %881 = vmatpush1.msra.mxu0 0.0
        %882 = vmatprep.subr.mxu0 0.0
        %883 = vmatpush1.msra.mxu0 0.0
        %884 = vmatprep.subr.mxu0 0.0
        %885 = vmatpush1.msra.mxu0 0.0
        %886 = vmatprep.subr.mxu0 0.0
        %887 = vmatpush1.msra.mxu0 0.0
        %888 = vmatprep.subr.mxu0 0.0
        %889 = vmatpush1.msra.mxu0 0.0
        %890 = vmatprep.subr.mxu0 0.0
        %891 = vmatpush1.msra.mxu0 0.0
        %892 = vmatprep.subr.mxu0 0.0
        %893 = vmatpush1.msra.mxu0 0.0
        %894 = vmatprep.subr.mxu0 0.0
        %895 = vmatpush1.msra.mxu0 0.0
        %896 = vmatprep.subr.mxu0 0.0
        %897 = vmatpush1.msra.mxu0 0.0
        %898 = vmatprep.subr.mxu0 0.0
        %899 = vmatpush1.msra.mxu0 0.0
        %900 = vmatprep.subr.mxu0 0.0
        %901 = vmatpush1.msra.mxu0 0.0
        %902 = vmatprep.subr.mxu0 0.0
        %903 = vmatpush1.msra.mxu0 0.0
        %904 = vmatprep.subr.mxu0 0.0
        %905 = vmatpush1.msra.mxu0 0.0
        %906 = vmatprep.subr.mxu0 0.0
        %907 = vmatpush1.msra.mxu0 0.0
        %908 = vmatprep.subr.mxu0 0.0
        %909 = vmatpush1.msra.mxu0 0.0
        %910 = vmatprep.subr.mxu0 0.0
        %911 = vmatpush1.msra.mxu0 0.0
        %912 = vmatprep.subr.mxu0 0.0
        %913 = vmatpush1.msra.mxu0 0.0
        %914 = vmatprep.subr.mxu0 0.0
        %915 = vmatpush1.msra.mxu0 0.0
        %916 = vmatprep.subr.mxu0 0.0
        %917 = vmatpush1.msra.mxu0 0.0
        %918 = vmatprep.subr.mxu0 0.0
        %919 = vmatpush1.msra.mxu0 0.0
        %920 = vmatprep.subr.mxu0 0.0
        %921 = vmatpush1.msra.mxu0 0.0
        %922 = vmatprep.mubr.f32.mxu0 0.0
        %923 = vmatmul.mubr.f32.gmra.mrb[0].mxu0 %v856
        %v924 = vpop.f32.mrb[0].mxu0
        %v925 = vadd.f32 0.0, %v924
        %v926 = vpop.f32.mrb[0].mxu0
        %927 = vdwg.mxu0
        %v928 = vld [vmem:[#allocation8] sm:$0xff]
        %v929 = vld [vmem:[#allocation8 + $0x8] sm:$0xff]
        %v930 = vld [vmem:[#allocation8 + $0x10] sm:$0xff]
        %v931 = vld [vmem:[#allocation8 + $0x18] sm:$0xff]
        %v932 = vld [vmem:[#allocation8 + $0x20] sm:$0xff]
        %v933 = vld [vmem:[#allocation8 + $0x28] sm:$0xff]
        %v934 = vld [vmem:[#allocation8 + $0x30] sm:$0xff]
        %v935 = vld [vmem:[#allocation8 + $0x38] sm:$0xff]
        %v936 = vld [vmem:[#allocation8 + $0x40] sm:$0xff]
        %v937 = vld [vmem:[#allocation8 + $0x48] sm:$0xff]
        %v938 = vld [vmem:[#allocation8 + $0x50] sm:$0xff]
        %v939 = vld [vmem:[#allocation8 + $0x58] sm:$0xff]
        %v940 = vld [vmem:[#allocation8 + $0x60] sm:$0xff]
        %v941 = vld [vmem:[#allocation8 + $0x68] sm:$0xff]
        %v942 = vld [vmem:[#allocation8 + $0x70] sm:$0xff]
        %v943 = vld [vmem:[#allocation8 + $0x78] sm:$0xff]
        %v944 = vld [vmem:[#allocation8 + $0x80] sm:$0xff]
        %v945 = vld [vmem:[#allocation8 + $0x88] sm:$0xff]
        %v946 = vld [vmem:[#allocation8 + $0x90] sm:$0xff]
        %v947 = vld [vmem:[#allocation8 + $0x98] sm:$0xff]
        %v948 = vld [vmem:[#allocation8 + $0xa0] sm:$0xff]
        %v949 = vld [vmem:[#allocation8 + $0xa8] sm:$0xff]
        %v950 = vld [vmem:[#allocation8 + $0xb0] sm:$0xff]
        %v951 = vld [vmem:[#allocation8 + $0xb8] sm:$0xff]
        %v952 = vld [vmem:[#allocation8 + $0xc0] sm:$0xff]
        %v953 = vld [vmem:[#allocation8 + $0xc8] sm:$0xff]
        %v954 = vld [vmem:[#allocation8 + $0xd0] sm:$0xff]
        %v955 = vld [vmem:[#allocation8 + $0xd8] sm:$0xff]
        %v956 = vld [vmem:[#allocation8 + $0xe0] sm:$0xff]
        %v957 = vld [vmem:[#allocation8 + $0xe8] sm:$0xff]
        %v958 = vld [vmem:[#allocation8 + $0xf0] sm:$0xff]
        %v959 = vld [vmem:[#allocation8 + $0xf8] sm:$0xff]
        %v960 = vld [vmem:[#allocation8 + $0x100] sm:$0xff]
        %v961 = vld [vmem:[#allocation8 + $0x108] sm:$0xff]
        %v962 = vld [vmem:[#allocation8 + $0x110] sm:$0xff]
        %v963 = vld [vmem:[#allocation8 + $0x118] sm:$0xff]
        %v964 = vld [vmem:[#allocation8 + $0x120] sm:$0xff]
        %v965 = vld [vmem:[#allocation8 + $0x128] sm:$0xff]
        %v966 = vld [vmem:[#allocation8 + $0x130] sm:$0xff]
        %v967 = vld [vmem:[#allocation8 + $0x138] sm:$0xff]
        %v968 = vld [vmem:[#allocation8 + $0x140] sm:$0xff]
        %v969 = vld [vmem:[#allocation8 + $0x148] sm:$0xff]
        %v970 = vld [vmem:[#allocation8 + $0x150] sm:$0xff]
        %v971 = vld [vmem:[#allocation8 + $0x158] sm:$0xff]
        %v972 = vld [vmem:[#allocation8 + $0x160] sm:$0xff]
        %v973 = vld [vmem:[#allocation8 + $0x168] sm:$0xff]
        %v974 = vld [vmem:[#allocation8 + $0x170] sm:$0xff]
        %v975 = vld [vmem:[#allocation8 + $0x178] sm:$0xff]
        %v976 = vld [vmem:[%s5] sm:$0x7]
        %v978 = vlaneseq
        %v979 = vshrl.u32 %v978, 7
        %v980 = vsub.s32 0, %v979
        %v981 = vrot.slane %v976, %v980
        %v982 = vlaneseq
        %v983 = vshrl.u32 %v982, 7
        %v984 = vsub.s32 1, %v983
        %v985 = vrot.slane %v976, %v984
        %v986 = vlaneseq
        %v987 = vshrl.u32 %v986, 7
        %v988 = vsub.s32 2, %v987
        %v989 = vrot.slane %v976, %v988
        %993 = vmatprep.subr.mxu0 %v929
        %994 = vmatpush1.msra.mxu0 %v928
        %995 = vmatprep.subr.mxu0 %v932
        %996 = vmatpush1.msra.mxu0 %v931
        %997 = vmatprep.subr.mxu0 %v935
        %998 = vmatpush1.msra.mxu0 %v934
        %999 = vmatprep.subr.mxu0 %v938
        %1000 = vmatpush1.msra.mxu0 %v937
        %1001 = vmatprep.subr.mxu0 %v941
        %1002 = vmatpush1.msra.mxu0 %v940
        %1003 = vmatprep.subr.mxu0 %v944
        %1004 = vmatpush1.msra.mxu0 %v943
        %1005 = vmatprep.subr.mxu0 %v947
        %1006 = vmatpush1.msra.mxu0 %v946
        %1007 = vmatprep.subr.mxu0 %v950
        %1008 = vmatpush1.msra.mxu0 %v949
        %1009 = vmatprep.subr.mxu0 %v953
        %1010 = vmatpush1.msra.mxu0 %v952
        %1011 = vmatprep.subr.mxu0 %v956
        %1012 = vmatpush1.msra.mxu0 %v955
        %1013 = vmatprep.subr.mxu0 %v959
        %1014 = vmatpush1.msra.mxu0 %v958
        %1015 = vmatprep.subr.mxu0 %v962
        %1016 = vmatpush1.msra.mxu0 %v961
        %1017 = vmatprep.subr.mxu0 %v965
        %1018 = vmatpush1.msra.mxu0 %v964
        %1019 = vmatprep.subr.mxu0 %v968
        %1020 = vmatpush1.msra.mxu0 %v967
        %1021 = vmatprep.subr.mxu0 %v971
        %1022 = vmatpush1.msra.mxu0 %v970
        %1023 = vmatprep.subr.mxu0 %v974
        %1024 = vmatpush1.msra.mxu0 %v973
        %1025 = vmatprep.subr.mxu0 0.0
        %1026 = vmatpush1.msra.mxu0 0.0
        %1027 = vmatprep.subr.mxu0 0.0
        %1028 = vmatpush1.msra.mxu0 0.0
        %1029 = vmatprep.subr.mxu0 0.0
        %1030 = vmatpush1.msra.mxu0 0.0
        %1031 = vmatprep.subr.mxu0 0.0
        %1032 = vmatpush1.msra.mxu0 0.0
        %1033 = vmatprep.subr.mxu0 0.0
        %1034 = vmatpush1.msra.mxu0 0.0
        %1035 = vmatprep.subr.mxu0 0.0
        %1036 = vmatpush1.msra.mxu0 0.0
        %1037 = vmatprep.subr.mxu0 0.0
        %1038 = vmatpush1.msra.mxu0 0.0
        %1039 = vmatprep.subr.mxu0 0.0
        %1040 = vmatpush1.msra.mxu0 0.0
        %1041 = vmatprep.subr.mxu0 0.0
        %1042 = vmatpush1.msra.mxu0 0.0
        %1043 = vmatprep.subr.mxu0 0.0
        %1044 = vmatpush1.msra.mxu0 0.0
        %1045 = vmatprep.subr.mxu0 0.0
        %1046 = vmatpush1.msra.mxu0 0.0
        %1047 = vmatprep.subr.mxu0 0.0
        %1048 = vmatpush1.msra.mxu0 0.0
        %1049 = vmatprep.subr.mxu0 0.0
        %1050 = vmatpush1.msra.mxu0 0.0
        %1051 = vmatprep.subr.mxu0 0.0
        %1052 = vmatpush1.msra.mxu0 0.0
        %1053 = vmatprep.subr.mxu0 0.0
        %1054 = vmatpush1.msra.mxu0 0.0
        %1055 = vmatprep.subr.mxu0 0.0
        %1056 = vmatpush1.msra.mxu0 0.0
        %1057 = vmatprep.mubr.f32.mxu0 0.0
        %1058 = vmatmul.mubr.f32.gmra.mrb[0].mxu0 %v566
        %v1059 = vpop.f32.mrb[0].mxu0
        %v1060 = vadd.f32 %v981, %v1059
        %v1061 = vpop.f32.mrb[0].mxu0
        %v1062 = vadd.f32 %v985, %v1061
        %1063 = vdwg.mxu0
        %1064 = vmatprep.subr.mxu0 0.0
        %1065 = vmatpush1.msra.mxu0 %v930
        %1066 = vmatprep.subr.mxu0 0.0
        %1067 = vmatpush1.msra.mxu0 %v933
        %1068 = vmatprep.subr.mxu0 0.0
        %1069 = vmatpush1.msra.mxu0 %v936
        %1070 = vmatprep.subr.mxu0 0.0
        %1071 = vmatpush1.msra.mxu0 %v939
        %1072 = vmatprep.subr.mxu0 0.0
        %1073 = vmatpush1.msra.mxu0 %v942
        %1074 = vmatprep.subr.mxu0 0.0
        %1075 = vmatpush1.msra.mxu0 %v945
        %1076 = vmatprep.subr.mxu0 0.0
        %1077 = vmatpush1.msra.mxu0 %v948
        %1078 = vmatprep.subr.mxu0 0.0
        %1079 = vmatpush1.msra.mxu0 %v951
        %1080 = vmatprep.subr.mxu0 0.0
        %1081 = vmatpush1.msra.mxu0 %v954
        %1082 = vmatprep.subr.mxu0 0.0
        %1083 = vmatpush1.msra.mxu0 %v957
        %1084 = vmatprep.subr.mxu0 0.0
        %1085 = vmatpush1.msra.mxu0 %v960
        %1086 = vmatprep.subr.mxu0 0.0
        %1087 = vmatpush1.msra.mxu0 %v963
        %1088 = vmatprep.subr.mxu0 0.0
        %1089 = vmatpush1.msra.mxu0 %v966
        %1090 = vmatprep.subr.mxu0 0.0
        %1091 = vmatpush1.msra.mxu0 %v969
        %1092 = vmatprep.subr.mxu0 0.0
        %1093 = vmatpush1.msra.mxu0 %v972
        %1094 = vmatprep.subr.mxu0 0.0
        %1095 = vmatpush1.msra.mxu0 %v975
        %1096 = vmatprep.subr.mxu0 0.0
        %1097 = vmatpush1.msra.mxu0 0.0
        %1098 = vmatprep.subr.mxu0 0.0
        %1099 = vmatpush1.msra.mxu0 0.0
        %1100 = vmatprep.subr.mxu0 0.0
        %1101 = vmatpush1.msra.mxu0 0.0
        %1102 = vmatprep.subr.mxu0 0.0
        %1103 = vmatpush1.msra.mxu0 0.0
        %1104 = vmatprep.subr.mxu0 0.0
        %1105 = vmatpush1.msra.mxu0 0.0
        %1106 = vmatprep.subr.mxu0 0.0
        %1107 = vmatpush1.msra.mxu0 0.0
        %1108 = vmatprep.subr.mxu0 0.0
        %1109 = vmatpush1.msra.mxu0 0.0
        %1110 = vmatprep.subr.mxu0 0.0
        %1111 = vmatpush1.msra.mxu0 0.0
        %1112 = vmatprep.subr.mxu0 0.0
        %1113 = vmatpush1.msra.mxu0 0.0
        %1114 = vmatprep.subr.mxu0 0.0
        %1115 = vmatpush1.msra.mxu0 0.0
        %1116 = vmatprep.subr.mxu0 0.0
        %1117 = vmatpush1.msra.mxu0 0.0
        %1118 = vmatprep.subr.mxu0 0.0
        %1119 = vmatpush1.msra.mxu0 0.0
        %1120 = vmatprep.subr.mxu0 0.0
        %1121 = vmatpush1.msra.mxu0 0.0
        %1122 = vmatprep.subr.mxu0 0.0
        %1123 = vmatpush1.msra.mxu0 0.0
        %1124 = vmatprep.subr.mxu0 0.0
        %1125 = vmatpush1.msra.mxu0 0.0
        %1126 = vmatprep.subr.mxu0 0.0
        %1127 = vmatpush1.msra.mxu0 0.0
        %1128 = vmatprep.mubr.f32.mxu0 0.0
        %1129 = vmatmul.mubr.f32.gmra.mrb[0].mxu0 %v566
        %v1130 = vpop.f32.mrb[0].mxu0
        %v1131 = vadd.f32 %v989, %v1130
        %v1132 = vpop.f32.mrb[0].mxu0
        %1133 = vdwg.mxu0
        %v1134 = vld [vmem:[%s12] sm:$0xff]
        %1135 = vmatprep.subr.mxu0 0.0
        %1136 = vmatpush1.xpose.msra.mxu0 %v1062
        %1137 = vmatprep.subr.mxu0 0.0
        %1138 = vmatpush1.xpose.msra.mxu0 0.0
        %1139 = vmatprep.subr.mxu0 0.0
        %1140 = vmatpush1.xpose.msra.mxu0 0.0
        %1141 = vmatprep.subr.mxu0 0.0
        %1142 = vmatpush1.xpose.msra.mxu0 0.0
        %1143 = vmatprep.subr.mxu0 0.0
        %1144 = vmatpush1.xpose.msra.mxu0 0.0
        %1145 = vmatprep.subr.mxu0 0.0
        %1146 = vmatpush1.xpose.msra.mxu0 0.0
        %1147 = vmatprep.subr.mxu0 0.0
        %1148 = vmatpush1.xpose.msra.mxu0 0.0
        %1149 = vmatprep.subr.mxu0 0.0
        %1150 = vmatpush1.xpose.msra.mxu0 0.0
        %1151 = vmatprep.subr.mxu0 0.0
        %1152 = vmatpush1.xpose.msra.mxu0 0.0
        %1153 = vmatprep.subr.mxu0 0.0
        %1154 = vmatpush1.xpose.msra.mxu0 0.0
        %1155 = vmatprep.subr.mxu0 0.0
        %1156 = vmatpush1.xpose.msra.mxu0 0.0
        %1157 = vmatprep.subr.mxu0 0.0
        %1158 = vmatpush1.xpose.msra.mxu0 0.0
        %1159 = vmatprep.subr.mxu0 0.0
        %1160 = vmatpush1.xpose.msra.mxu0 0.0
        %1161 = vmatprep.subr.mxu0 0.0
        %1162 = vmatpush1.xpose.msra.mxu0 0.0
        %1163 = vmatprep.subr.mxu0 0.0
        %1164 = vmatpush1.xpose.msra.mxu0 0.0
        %1165 = vmatprep.subr.mxu0 0.0
        %1166 = vmatpush1.xpose.msra.mxu0 0.0
        %1167 = vmatprep.subr.mxu0 0.0
        %1168 = vmatpush1.xpose.msra.mxu0 0.0
        %1169 = vmatprep.subr.mxu0 0.0
        %1170 = vmatpush1.xpose.msra.mxu0 0.0
        %1171 = vmatprep.subr.mxu0 0.0
        %1172 = vmatpush1.xpose.msra.mxu0 0.0
        %1173 = vmatprep.subr.mxu0 0.0
        %1174 = vmatpush1.xpose.msra.mxu0 0.0
        %1175 = vmatprep.subr.mxu0 0.0
        %1176 = vmatpush1.xpose.msra.mxu0 0.0
        %1177 = vmatprep.subr.mxu0 0.0
        %1178 = vmatpush1.xpose.msra.mxu0 0.0
        %1179 = vmatprep.subr.mxu0 0.0
        %1180 = vmatpush1.xpose.msra.mxu0 0.0
        %1181 = vmatprep.subr.mxu0 0.0
        %1182 = vmatpush1.xpose.msra.mxu0 0.0
        %1183 = vmatprep.subr.mxu0 0.0
        %1184 = vmatpush1.xpose.msra.mxu0 0.0
        %1185 = vmatprep.subr.mxu0 0.0
        %1186 = vmatpush1.xpose.msra.mxu0 0.0
        %1187 = vmatprep.subr.mxu0 0.0
        %1188 = vmatpush1.xpose.msra.mxu0 0.0
        %1189 = vmatprep.subr.mxu0 0.0
        %1190 = vmatpush1.xpose.msra.mxu0 0.0
        %1191 = vmatprep.subr.mxu0 0.0
        %1192 = vmatpush1.xpose.msra.mxu0 0.0
        %1193 = vmatprep.subr.mxu0 0.0
        %1194 = vmatpush1.xpose.msra.mxu0 0.0
        %1195 = vmatprep.subr.mxu0 0.0
        %1196 = vmatpush1.xpose.msra.mxu0 0.0
        %1197 = vmatprep.subr.mxu0 0.0
        %1198 = vmatpush1.xpose.msra.mxu0 0.0
        %1199 = vmatprep.mubr.f32.mxu0 0.0
        %1200 = vmatmul.mubr.f32.gmra.mrb[0].mxu0 %v1060
        %v1201 = vpop.f32.mrb[0].mxu0
        %v1202 = vadd.f32 %v1134, %v1201
        %v1203 = vpop.f32.mrb[0].mxu0
        %1204 = vdwg.mxu0
        %v1205 = vsel %vm843, %v1202, -inf
        %1206 = vmax.xlane.f32.xlu0 %v1205
        %v1207 = vpop.xlane.xlu0 %1206
        %v1208 = vsub.f32 %v1202, %v1207
        %v1209 = vmul.f32 %v1208, 1.442695
        %v1210 = vpow.pop %v1209
        %v1211 = vsel %vm843, %v1210, 0.0
        %1212 = vadd.xlane.f32.xlu0 %v1211
        %v1213 = vpop.xlane.xlu0 %1212
        %v1214 = vrcp.pop %v1213
        %v1215 = vmul.f32 %v1210, %v1214
        %v1217 = vsel %vm843, %v1215, 0
        %1219 = vmatprep.subr.mxu0 0.0
        %1220 = vmatpush1.msra.mxu0 %v1131
        %1221 = vmatprep.subr.mxu0 0.0
        %1222 = vmatpush1.msra.mxu0 0.0
        %1223 = vmatprep.subr.mxu0 0.0
        %1224 = vmatpush1.msra.mxu0 0.0
        %1225 = vmatprep.subr.mxu0 0.0
        %1226 = vmatpush1.msra.mxu0 0.0
        %1227 = vmatprep.subr.mxu0 0.0
        %1228 = vmatpush1.msra.mxu0 0.0
        %1229 = vmatprep.subr.mxu0 0.0
        %1230 = vmatpush1.msra.mxu0 0.0
        %1231 = vmatprep.subr.mxu0 0.0
        %1232 = vmatpush1.msra.mxu0 0.0
        %1233 = vmatprep.subr.mxu0 0.0
        %1234 = vmatpush1.msra.mxu0 0.0
        %1235 = vmatprep.subr.mxu0 0.0
        %1236 = vmatpush1.msra.mxu0 0.0
        %1237 = vmatprep.subr.mxu0 0.0
        %1238 = vmatpush1.msra.mxu0 0.0
        %1239 = vmatprep.subr.mxu0 0.0
        %1240 = vmatpush1.msra.mxu0 0.0
        %1241 = vmatprep.subr.mxu0 0.0
        %1242 = vmatpush1.msra.mxu0 0.0
        %1243 = vmatprep.subr.mxu0 0.0
        %1244 = vmatpush1.msra.mxu0 0.0
        %1245 = vmatprep.subr.mxu0 0.0
        %1246 = vmatpush1.msra.mxu0 0.0
        %1247 = vmatprep.subr.mxu0 0.0
        %1248 = vmatpush1.msra.mxu0 0.0
        %1249 = vmatprep.subr.mxu0 0.0
        %1250 = vmatpush1.msra.mxu0 0.0
        %1251 = vmatprep.subr.mxu0 0.0
        %1252 = vmatpush1.msra.mxu0 0.0
        %1253 = vmatprep.subr.mxu0 0.0
        %1254 = vmatpush1.msra.mxu0 0.0
        %1255 = vmatprep.subr.mxu0 0.0
        %1256 = vmatpush1.msra.mxu0 0.0
        %1257 = vmatprep.subr.mxu0 0.0
        %1258 = vmatpush1.msra.mxu0 0.0
        %1259 = vmatprep.subr.mxu0 0.0
        %1260 = vmatpush1.msra.mxu0 0.0
        %1261 = vmatprep.subr.mxu0 0.0
        %1262 = vmatpush1.msra.mxu0 0.0
        %1263 = vmatprep.subr.mxu0 0.0
        %1264 = vmatpush1.msra.mxu0 0.0
        %1265 = vmatprep.subr.mxu0 0.0
        %1266 = vmatpush1.msra.mxu0 0.0
        %1267 = vmatprep.subr.mxu0 0.0
        %1268 = vmatpush1.msra.mxu0 0.0
        %1269 = vmatprep.subr.mxu0 0.0
        %1270 = vmatpush1.msra.mxu0 0.0
        %1271 = vmatprep.subr.mxu0 0.0
        %1272 = vmatpush1.msra.mxu0 0.0
        %1273 = vmatprep.subr.mxu0 0.0
        %1274 = vmatpush1.msra.mxu0 0.0
        %1275 = vmatprep.subr.mxu0 0.0
        %1276 = vmatpush1.msra.mxu0 0.0
        %1277 = vmatprep.subr.mxu0 0.0
        %1278 = vmatpush1.msra.mxu0 0.0
        %1279 = vmatprep.subr.mxu0 0.0
        %1280 = vmatpush1.msra.mxu0 0.0
        %1281 = vmatprep.subr.mxu0 0.0
        %1282 = vmatpush1.msra.mxu0 0.0
        %1283 = vmatprep.mubr.f32.mxu0 0.0
        %1284 = vmatmul.mubr.f32.gmra.mrb[0].mxu0 %v1217
        %v1285 = vpop.f32.mrb[0].mxu0
        %v1286 = vadd.f32 0.0, %v1285
        %v1287 = vpop.f32.mrb[0].mxu0
        %1288 = vdwg.mxu0
        %v1289 = vld [vmem:[#allocation11] sm:$0xff]
        %v1290 = vld [vmem:[#allocation11 + $0x8] sm:$0xff]
        %v1291 = vld [vmem:[#allocation11 + $0x10] sm:$0xff]
        %v1292 = vld [vmem:[#allocation11 + $0x18] sm:$0xff]
        %v1293 = vld [vmem:[#allocation11 + $0x20] sm:$0xff]
        %v1294 = vld [vmem:[#allocation11 + $0x28] sm:$0xff]
        %v1295 = vld [vmem:[#allocation11 + $0x30] sm:$0xff]
        %v1296 = vld [vmem:[#allocation11 + $0x38] sm:$0xff]
        %v1297 = vld [vmem:[#allocation11 + $0x40] sm:$0xff]
        %v1298 = vld [vmem:[#allocation11 + $0x48] sm:$0xff]
        %v1299 = vld [vmem:[#allocation11 + $0x50] sm:$0xff]
        %v1300 = vld [vmem:[#allocation11 + $0x58] sm:$0xff]
        %v1301 = vld [vmem:[#allocation11 + $0x60] sm:$0xff]
        %v1302 = vld [vmem:[#allocation11 + $0x68] sm:$0xff]
        %v1303 = vld [vmem:[#allocation11 + $0x70] sm:$0xff]
        %v1304 = vld [vmem:[#allocation11 + $0x78] sm:$0xff]
        %v1305 = vld [vmem:[%s9] sm:$0x1]
        %v1307 = vlaneseq
        %v1308 = vshrl.u32 %v1307, 7
        %v1309 = vsub.s32 0, %v1308
        %v1310 = vrot.slane %v1305, %v1309
        %1312 = vmatprep.subr.mxu0 0.0
        %1313 = vmatpush1.msra.mxu0 %v1289
        %1314 = vmatprep.subr.mxu0 0.0
        %1315 = vmatpush1.msra.mxu0 %v1290
        %1316 = vmatprep.subr.mxu0 0.0
        %1317 = vmatpush1.msra.mxu0 %v1291
        %1318 = vmatprep.subr.mxu0 0.0
        %1319 = vmatpush1.msra.mxu0 %v1292
        %1320 = vmatprep.subr.mxu0 0.0
        %1321 = vmatpush1.msra.mxu0 %v1293
        %1322 = vmatprep.subr.mxu0 0.0
        %1323 = vmatpush1.msra.mxu0 %v1294
        %1324 = vmatprep.subr.mxu0 0.0
        %1325 = vmatpush1.msra.mxu0 %v1295
        %1326 = vmatprep.subr.mxu0 0.0
        %1327 = vmatpush1.msra.mxu0 %v1296
        %1328 = vmatprep.subr.mxu0 0.0
        %1329 = vmatpush1.msra.mxu0 %v1297
        %1330 = vmatprep.subr.mxu0 0.0
        %1331 = vmatpush1.msra.mxu0 %v1298
        %1332 = vmatprep.subr.mxu0 0.0
        %1333 = vmatpush1.msra.mxu0 %v1299
        %1334 = vmatprep.subr.mxu0 0.0
        %1335 = vmatpush1.msra.mxu0 %v1300
        %1336 = vmatprep.subr.mxu0 0.0
        %1337 = vmatpush1.msra.mxu0 %v1301
        %1338 = vmatprep.subr.mxu0 0.0
        %1339 = vmatpush1.msra.mxu0 %v1302
        %1340 = vmatprep.subr.mxu0 0.0
        %1341 = vmatpush1.msra.mxu0 %v1303
        %1342 = vmatprep.subr.mxu0 0.0
        %1343 = vmatpush1.msra.mxu0 %v1304
        %1344 = vmatprep.subr.mxu0 0.0
        %1345 = vmatpush1.msra.mxu0 0.0
        %1346 = vmatprep.subr.mxu0 0.0
        %1347 = vmatpush1.msra.mxu0 0.0
        %1348 = vmatprep.subr.mxu0 0.0
        %1349 = vmatpush1.msra.mxu0 0.0
        %1350 = vmatprep.subr.mxu0 0.0
        %1351 = vmatpush1.msra.mxu0 0.0
        %1352 = vmatprep.subr.mxu0 0.0
        %1353 = vmatpush1.msra.mxu0 0.0
        %1354 = vmatprep.subr.mxu0 0.0
        %1355 = vmatpush1.msra.mxu0 0.0
        %1356 = vmatprep.subr.mxu0 0.0
        %1357 = vmatpush1.msra.mxu0 0.0
        %1358 = vmatprep.subr.mxu0 0.0
        %1359 = vmatpush1.msra.mxu0 0.0
        %1360 = vmatprep.subr.mxu0 0.0
        %1361 = vmatpush1.msra.mxu0 0.0
        %1362 = vmatprep.subr.mxu0 0.0
        %1363 = vmatpush1.msra.mxu0 0.0
        %1364 = vmatprep.subr.mxu0 0.0
        %1365 = vmatpush1.msra.mxu0 0.0
        %1366 = vmatprep.subr.mxu0 0.0
        %1367 = vmatpush1.msra.mxu0 0.0
        %1368 = vmatprep.subr.mxu0 0.0
        %1369 = vmatpush1.msra.mxu0 0.0
        %1370 = vmatprep.subr.mxu0 0.0
        %1371 = vmatpush1.msra.mxu0 0.0
        %1372 = vmatprep.subr.mxu0 0.0
        %1373 = vmatpush1.msra.mxu0 0.0
        %1374 = vmatprep.subr.mxu0 0.0
        %1375 = vmatpush1.msra.mxu0 0.0
        %1376 = vmatprep.mubr.f32.mxu0 0.0
        %1377 = vmatmul.mubr.f32.gmra.mrb[0].mxu0 %v1286
        %v1378 = vpop.f32.mrb[0].mxu0
        %v1379 = vadd.f32 %v1310, %v1378
        %v1380 = vpop.f32.mrb[0].mxu0
        %1381 = vdwg.mxu0
        %v1382 = vld [vmem:[#allocation10] sm:$0xff]
        %v1383 = vld [vmem:[#allocation10 + $0x8] sm:$0xff]
        %v1384 = vld [vmem:[#allocation10 + $0x10] sm:$0xff]
        %v1385 = vld [vmem:[#allocation10 + $0x18] sm:$0xff]
        %v1386 = vld [vmem:[#allocation10 + $0x20] sm:$0xff]
        %v1387 = vld [vmem:[#allocation10 + $0x28] sm:$0xff]
        %v1388 = vld [vmem:[#allocation10 + $0x30] sm:$0xff]
        %v1389 = vld [vmem:[#allocation10 + $0x38] sm:$0xff]
        %v1390 = vld [vmem:[#allocation10 + $0x40] sm:$0xff]
        %v1391 = vld [vmem:[#allocation10 + $0x48] sm:$0xff]
        %v1392 = vld [vmem:[#allocation10 + $0x50] sm:$0xff]
        %v1393 = vld [vmem:[#allocation10 + $0x58] sm:$0xff]
        %v1394 = vld [vmem:[#allocation10 + $0x60] sm:$0xff]
        %v1395 = vld [vmem:[#allocation10 + $0x68] sm:$0xff]
        %v1396 = vld [vmem:[#allocation10 + $0x70] sm:$0xff]
        %v1397 = vld [vmem:[#allocation10 + $0x78] sm:$0xff]
        %v1398 = vld [vmem:[#allocation10 + $0x80] sm:$0xff]
        %v1399 = vld [vmem:[#allocation10 + $0x88] sm:$0xff]
        %v1400 = vld [vmem:[#allocation10 + $0x90] sm:$0xff]
        %v1401 = vld [vmem:[#allocation10 + $0x98] sm:$0xff]
        %v1402 = vld [vmem:[#allocation10 + $0xa0] sm:$0xff]
        %v1403 = vld [vmem:[#allocation10 + $0xa8] sm:$0xff]
        %v1404 = vld [vmem:[#allocation10 + $0xb0] sm:$0xff]
        %v1405 = vld [vmem:[#allocation10 + $0xb8] sm:$0xff]
        %v1406 = vld [vmem:[#allocation10 + $0xc0] sm:$0xff]
        %v1407 = vld [vmem:[#allocation10 + $0xc8] sm:$0xff]
        %v1408 = vld [vmem:[#allocation10 + $0xd0] sm:$0xff]
        %v1409 = vld [vmem:[#allocation10 + $0xd8] sm:$0xff]
        %v1410 = vld [vmem:[#allocation10 + $0xe0] sm:$0xff]
        %v1411 = vld [vmem:[#allocation10 + $0xe8] sm:$0xff]
        %v1412 = vld [vmem:[#allocation10 + $0xf0] sm:$0xff]
        %v1413 = vld [vmem:[#allocation10 + $0xf8] sm:$0xff]
        %v1414 = vld [vmem:[%s7] sm:$0x3]
        %v1416 = vlaneseq
        %v1417 = vshrl.u32 %v1416, 7
        %v1418 = vsub.s32 0, %v1417
        %v1419 = vrot.slane %v1414, %v1418
        %v1420 = vlaneseq
        %v1421 = vshrl.u32 %v1420, 7
        %v1422 = vsub.s32 1, %v1421
        %v1423 = vrot.slane %v1414, %v1422
        %1426 = vmatprep.subr.mxu0 %v1383
        %1427 = vmatpush1.msra.mxu0 %v1382
        %1428 = vmatprep.subr.mxu0 %v1385
        %1429 = vmatpush1.msra.mxu0 %v1384
        %1430 = vmatprep.subr.mxu0 %v1387
        %1431 = vmatpush1.msra.mxu0 %v1386
        %1432 = vmatprep.subr.mxu0 %v1389
        %1433 = vmatpush1.msra.mxu0 %v1388
        %1434 = vmatprep.subr.mxu0 %v1391
        %1435 = vmatpush1.msra.mxu0 %v1390
        %1436 = vmatprep.subr.mxu0 %v1393
        %1437 = vmatpush1.msra.mxu0 %v1392
        %1438 = vmatprep.subr.mxu0 %v1395
        %1439 = vmatpush1.msra.mxu0 %v1394
        %1440 = vmatprep.subr.mxu0 %v1397
        %1441 = vmatpush1.msra.mxu0 %v1396
        %1442 = vmatprep.subr.mxu0 %v1399
        %1443 = vmatpush1.msra.mxu0 %v1398
        %1444 = vmatprep.subr.mxu0 %v1401
        %1445 = vmatpush1.msra.mxu0 %v1400
        %1446 = vmatprep.subr.mxu0 %v1403
        %1447 = vmatpush1.msra.mxu0 %v1402
        %1448 = vmatprep.subr.mxu0 %v1405
        %1449 = vmatpush1.msra.mxu0 %v1404
        %1450 = vmatprep.subr.mxu0 %v1407
        %1451 = vmatpush1.msra.mxu0 %v1406
        %1452 = vmatprep.subr.mxu0 %v1409
        %1453 = vmatpush1.msra.mxu0 %v1408
        %1454 = vmatprep.subr.mxu0 %v1411
        %1455 = vmatpush1.msra.mxu0 %v1410
        %1456 = vmatprep.subr.mxu0 %v1413
        %1457 = vmatpush1.msra.mxu0 %v1412
        %1458 = vmatprep.subr.mxu0 0.0
        %1459 = vmatpush1.msra.mxu0 0.0
        %1460 = vmatprep.subr.mxu0 0.0
        %1461 = vmatpush1.msra.mxu0 0.0
        %1462 = vmatprep.subr.mxu0 0.0
        %1463 = vmatpush1.msra.mxu0 0.0
        %1464 = vmatprep.subr.mxu0 0.0
        %1465 = vmatpush1.msra.mxu0 0.0
        %1466 = vmatprep.subr.mxu0 0.0
        %1467 = vmatpush1.msra.mxu0 0.0
        %1468 = vmatprep.subr.mxu0 0.0
        %1469 = vmatpush1.msra.mxu0 0.0
        %1470 = vmatprep.subr.mxu0 0.0
        %1471 = vmatpush1.msra.mxu0 0.0
        %1472 = vmatprep.subr.mxu0 0.0
        %1473 = vmatpush1.msra.mxu0 0.0
        %1474 = vmatprep.subr.mxu0 0.0
        %1475 = vmatpush1.msra.mxu0 0.0
        %1476 = vmatprep.subr.mxu0 0.0
        %1477 = vmatpush1.msra.mxu0 0.0
        %1478 = vmatprep.subr.mxu0 0.0
        %1479 = vmatpush1.msra.mxu0 0.0
        %1480 = vmatprep.subr.mxu0 0.0
        %1481 = vmatpush1.msra.mxu0 0.0
        %1482 = vmatprep.subr.mxu0 0.0
        %1483 = vmatpush1.msra.mxu0 0.0
        %1484 = vmatprep.subr.mxu0 0.0
        %1485 = vmatpush1.msra.mxu0 0.0
        %1486 = vmatprep.subr.mxu0 0.0
        %1487 = vmatpush1.msra.mxu0 0.0
        %1488 = vmatprep.subr.mxu0 0.0
        %1489 = vmatpush1.msra.mxu0 0.0
        %1490 = vmatprep.mubr.f32.mxu0 0.0
        %1491 = vmatmul.mubr.f32.gmra.mrb[0].mxu0 %v925
        %v1492 = vpop.f32.mrb[0].mxu0
        %v1493 = vadd.f32 %v1419, %v1492
        %v1494 = vpop.f32.mrb[0].mxu0
        %v1495 = vadd.f32 %v1423, %v1494
        %1496 = vdwg.mxu0
        %1497 = vmatprep.subr.mxu0 0.0
        %1498 = vmatpush1.xpose.msra.mxu0 %v1493
        %1499 = vmatprep.subr.mxu0 0.0
        %1500 = vmatpush1.xpose.msra.mxu0 0.0
        %1501 = vmatprep.subr.mxu0 0.0
        %1502 = vmatpush1.xpose.msra.mxu0 0.0
        %1503 = vmatprep.subr.mxu0 0.0
        %1504 = vmatpush1.xpose.msra.mxu0 0.0
        %1505 = vmatprep.subr.mxu0 0.0
        %1506 = vmatpush1.xpose.msra.mxu0 0.0
        %1507 = vmatprep.subr.mxu0 0.0
        %1508 = vmatpush1.xpose.msra.mxu0 0.0
        %1509 = vmatprep.subr.mxu0 0.0
        %1510 = vmatpush1.xpose.msra.mxu0 0.0
        %1511 = vmatprep.subr.mxu0 0.0
        %1512 = vmatpush1.xpose.msra.mxu0 0.0
        %1513 = vmatprep.subr.mxu0 0.0
        %1514 = vmatpush1.xpose.msra.mxu0 0.0
        %1515 = vmatprep.subr.mxu0 0.0
        %1516 = vmatpush1.xpose.msra.mxu0 0.0
        %1517 = vmatprep.subr.mxu0 0.0
        %1518 = vmatpush1.xpose.msra.mxu0 0.0
        %1519 = vmatprep.subr.mxu0 0.0
        %1520 = vmatpush1.xpose.msra.mxu0 0.0
        %1521 = vmatprep.subr.mxu0 0.0
        %1522 = vmatpush1.xpose.msra.mxu0 0.0
        %1523 = vmatprep.subr.mxu0 0.0
        %1524 = vmatpush1.xpose.msra.mxu0 0.0
        %1525 = vmatprep.subr.mxu0 0.0
        %1526 = vmatpush1.xpose.msra.mxu0 0.0
        %1527 = vmatprep.subr.mxu0 0.0
        %1528 = vmatpush1.xpose.msra.mxu0 0.0
        %1529 = vmatprep.subr.mxu0 0.0
        %1530 = vmatpush1.xpose.msra.mxu0 0.0
        %1531 = vmatprep.subr.mxu0 0.0
        %1532 = vmatpush1.xpose.msra.mxu0 0.0
        %1533 = vmatprep.subr.mxu0 0.0
        %1534 = vmatpush1.xpose.msra.mxu0 0.0
        %1535 = vmatprep.subr.mxu0 0.0
        %1536 = vmatpush1.xpose.msra.mxu0 0.0
        %1537 = vmatprep.subr.mxu0 0.0
        %1538 = vmatpush1.xpose.msra.mxu0 0.0
        %1539 = vmatprep.subr.mxu0 0.0
        %1540 = vmatpush1.xpose.msra.mxu0 0.0
        %1541 = vmatprep.subr.mxu0 0.0
        %1542 = vmatpush1.xpose.msra.mxu0 0.0
        %1543 = vmatprep.subr.mxu0 0.0
        %1544 = vmatpush1.xpose.msra.mxu0 0.0
        %1545 = vmatprep.subr.mxu0 0.0
        %1546 = vmatpush1.xpose.msra.mxu0 0.0
        %1547 = vmatprep.subr.mxu0 0.0
        %1548 = vmatpush1.xpose.msra.mxu0 0.0
        %1549 = vmatprep.subr.mxu0 0.0
        %1550 = vmatpush1.xpose.msra.mxu0 0.0
        %1551 = vmatprep.subr.mxu0 0.0
        %1552 = vmatpush1.xpose.msra.mxu0 0.0
        %1553 = vmatprep.subr.mxu0 0.0
        %1554 = vmatpush1.xpose.msra.mxu0 0.0
        %1555 = vmatprep.subr.mxu0 0.0
        %1556 = vmatpush1.xpose.msra.mxu0 0.0
        %1557 = vmatprep.subr.mxu0 0.0
        %1558 = vmatpush1.xpose.msra.mxu0 0.0
        %1559 = vmatprep.subr.mxu0 0.0
        %1560 = vmatpush1.xpose.msra.mxu0 0.0
        %1561 = vmatprep.mubr.f32.mxu0 0.0
        %1562 = vmatmul.mubr.f32.gmra.mrb[0].mxu0 %v1379
        %v1563 = vpop.f32.mrb[0].mxu0
        %v1564 = vadd.f32 0.0, %v1563
        %v1565 = vpop.f32.mrb[0].mxu0
        %1566 = vdwg.mxu0
        %v1567 = vsel %vm843, %v1564, -inf
        %1568 = vmax.xlane.f32.xlu0 %v1567
        %v1569 = vpop.xlane.xlu0 %1568
        %v1570 = vsub.f32 %v1564, %v1569
        %v1571 = vmul.f32 %v1570, 1.442695
        %v1572 = vpow.pop %v1571
        %v1573 = vsel %vm843, %v1572, 0.0
        %1574 = vadd.xlane.f32.xlu0 %v1573
        %v1575 = vpop.xlane.xlu0 %1574
        %v1576 = vrcp.pop %v1575
        %v1577 = vmul.f32 %v1572, %v1576
        %v1579 = vsel %vm843, %v1577, 0
        %1581 = vmatprep.subr.mxu0 0.0
        %1582 = vmatpush1.msra.mxu0 %v1495
        %1583 = vmatprep.subr.mxu0 0.0
        %1584 = vmatpush1.msra.mxu0 0.0
        %1585 = vmatprep.subr.mxu0 0.0
        %1586 = vmatpush1.msra.mxu0 0.0
        %1587 = vmatprep.subr.mxu0 0.0
        %1588 = vmatpush1.msra.mxu0 0.0
        %1589 = vmatprep.subr.mxu0 0.0
        %1590 = vmatpush1.msra.mxu0 0.0
        %1591 = vmatprep.subr.mxu0 0.0
        %1592 = vmatpush1.msra.mxu0 0.0
        %1593 = vmatprep.subr.mxu0 0.0
        %1594 = vmatpush1.msra.mxu0 0.0
        %1595 = vmatprep.subr.mxu0 0.0
        %1596 = vmatpush1.msra.mxu0 0.0
        %1597 = vmatprep.subr.mxu0 0.0
        %1598 = vmatpush1.msra.mxu0 0.0
        %1599 = vmatprep.subr.mxu0 0.0
        %1600 = vmatpush1.msra.mxu0 0.0
        %1601 = vmatprep.subr.mxu0 0.0
        %1602 = vmatpush1.msra.mxu0 0.0
        %1603 = vmatprep.subr.mxu0 0.0
        %1604 = vmatpush1.msra.mxu0 0.0
        %1605 = vmatprep.subr.mxu0 0.0
        %1606 = vmatpush1.msra.mxu0 0.0
        %1607 = vmatprep.subr.mxu0 0.0
        %1608 = vmatpush1.msra.mxu0 0.0
        %1609 = vmatprep.subr.mxu0 0.0
        %1610 = vmatpush1.msra.mxu0 0.0
        %1611 = vmatprep.subr.mxu0 0.0
        %1612 = vmatpush1.msra.mxu0 0.0
        %1613 = vmatprep.subr.mxu0 0.0
        %1614 = vmatpush1.msra.mxu0 0.0
        %1615 = vmatprep.subr.mxu0 0.0
        %1616 = vmatpush1.msra.mxu0 0.0
        %1617 = vmatprep.subr.mxu0 0.0
        %1618 = vmatpush1.msra.mxu0 0.0
        %1619 = vmatprep.subr.mxu0 0.0
        %1620 = vmatpush1.msra.mxu0 0.0
        %1621 = vmatprep.subr.mxu0 0.0
        %1622 = vmatpush1.msra.mxu0 0.0
        %1623 = vmatprep.subr.mxu0 0.0
        %1624 = vmatpush1.msra.mxu0 0.0
        %1625 = vmatprep.subr.mxu0 0.0
        %1626 = vmatpush1.msra.mxu0 0.0
        %1627 = vmatprep.subr.mxu0 0.0
        %1628 = vmatpush1.msra.mxu0 0.0
        %1629 = vmatprep.subr.mxu0 0.0
        %1630 = vmatpush1.msra.mxu0 0.0
        %1631 = vmatprep.subr.mxu0 0.0
        %1632 = vmatpush1.msra.mxu0 0.0
        %1633 = vmatprep.subr.mxu0 0.0
        %1634 = vmatpush1.msra.mxu0 0.0
        %1635 = vmatprep.subr.mxu0 0.0
        %1636 = vmatpush1.msra.mxu0 0.0
        %1637 = vmatprep.subr.mxu0 0.0
        %1638 = vmatpush1.msra.mxu0 0.0
        %1639 = vmatprep.subr.mxu0 0.0
        %1640 = vmatpush1.msra.mxu0 0.0
        %1641 = vmatprep.subr.mxu0 0.0
        %1642 = vmatpush1.msra.mxu0 0.0
        %1643 = vmatprep.subr.mxu0 0.0
        %1644 = vmatpush1.msra.mxu0 0.0
        %1645 = vmatprep.mubr.f32.mxu0 0.0
        %1646 = vmatmul.mubr.f32.gmra.mrb[0].mxu0 %v1579
        %v1647 = vpop.f32.mrb[0].mxu0
        %v1648 = vadd.f32 %v1286, %v1647
        %v1649 = vpop.f32.mrb[0].mxu0
        %1650 = vdwg.mxu0
        %v1651 = vld [vmem:[#allocation13] sm:$0xff]
        %v1652 = vld [vmem:[#allocation13 + $0x8] sm:$0xff]
        %v1653 = vld [vmem:[#allocation13 + $0x10] sm:$0xff]
        %v1654 = vld [vmem:[#allocation13 + $0x18] sm:$0xff]
        %v1655 = vld [vmem:[#allocation13 + $0x20] sm:$0xff]
        %v1656 = vld [vmem:[#allocation13 + $0x28] sm:$0xff]
        %v1657 = vld [vmem:[#allocation13 + $0x30] sm:$0xff]
        %v1658 = vld [vmem:[#allocation13 + $0x38] sm:$0xff]
        %v1659 = vld [vmem:[#allocation13 + $0x40] sm:$0xff]
        %v1660 = vld [vmem:[#allocation13 + $0x48] sm:$0xff]
        %v1661 = vld [vmem:[#allocation13 + $0x50] sm:$0xff]
        %v1662 = vld [vmem:[#allocation13 + $0x58] sm:$0xff]
        %v1663 = vld [vmem:[#allocation13 + $0x60] sm:$0xff]
        %v1664 = vld [vmem:[#allocation13 + $0x68] sm:$0xff]
        %v1665 = vld [vmem:[#allocation13 + $0x70] sm:$0xff]
        %v1666 = vld [vmem:[#allocation13 + $0x78] sm:$0xff]
        %v1667 = vld [vmem:[%s11] sm:$0x1]
        %v1669 = vlaneseq
        %v1670 = vshrl.u32 %v1669, 7
        %v1671 = vsub.s32 0, %v1670
        %v1672 = vrot.slane %v1667, %v1671
        %1674 = vmatprep.subr.mxu0 0.0
        %1675 = vmatpush1.msra.mxu0 %v1651
        %1676 = vmatprep.subr.mxu0 0.0
        %1677 = vmatpush1.msra.mxu0 %v1652
        %1678 = vmatprep.subr.mxu0 0.0
        %1679 = vmatpush1.msra.mxu0 %v1653
        %1680 = vmatprep.subr.mxu0 0.0
        %1681 = vmatpush1.msra.mxu0 %v1654
        %1682 = vmatprep.subr.mxu0 0.0
        %1683 = vmatpush1.msra.mxu0 %v1655
        %1684 = vmatprep.subr.mxu0 0.0
        %1685 = vmatpush1.msra.mxu0 %v1656
        %1686 = vmatprep.subr.mxu0 0.0
        %1687 = vmatpush1.msra.mxu0 %v1657
        %1688 = vmatprep.subr.mxu0 0.0
        %1689 = vmatpush1.msra.mxu0 %v1658
        %1690 = vmatprep.subr.mxu0 0.0
        %1691 = vmatpush1.msra.mxu0 %v1659
        %1692 = vmatprep.subr.mxu0 0.0
        %1693 = vmatpush1.msra.mxu0 %v1660
        %1694 = vmatprep.subr.mxu0 0.0
        %1695 = vmatpush1.msra.mxu0 %v1661
        %1696 = vmatprep.subr.mxu0 0.0
        %1697 = vmatpush1.msra.mxu0 %v1662
        %1698 = vmatprep.subr.mxu0 0.0
        %1699 = vmatpush1.msra.mxu0 %v1663
        %1700 = vmatprep.subr.mxu0 0.0
        %1701 = vmatpush1.msra.mxu0 %v1664
        %1702 = vmatprep.subr.mxu0 0.0
        %1703 = vmatpush1.msra.mxu0 %v1665
        %1704 = vmatprep.subr.mxu0 0.0
        %1705 = vmatpush1.msra.mxu0 %v1666
        %1706 = vmatprep.subr.mxu0 0.0
        %1707 = vmatpush1.msra.mxu0 0.0
        %1708 = vmatprep.subr.mxu0 0.0
        %1709 = vmatpush1.msra.mxu0 0.0
        %1710 = vmatprep.subr.mxu0 0.0
        %1711 = vmatpush1.msra.mxu0 0.0
        %1712 = vmatprep.subr.mxu0 0.0
        %1713 = vmatpush1.msra.mxu0 0.0
        %1714 = vmatprep.subr.mxu0 0.0
        %1715 = vmatpush1.msra.mxu0 0.0
        %1716 = vmatprep.subr.mxu0 0.0
        %1717 = vmatpush1.msra.mxu0 0.0
        %1718 = vmatprep.subr.mxu0 0.0
        %1719 = vmatpush1.msra.mxu0 0.0
        %1720 = vmatprep.subr.mxu0 0.0
        %1721 = vmatpush1.msra.mxu0 0.0
        %1722 = vmatprep.subr.mxu0 0.0
        %1723 = vmatpush1.msra.mxu0 0.0
        %1724 = vmatprep.subr.mxu0 0.0
        %1725 = vmatpush1.msra.mxu0 0.0
        %1726 = vmatprep.subr.mxu0 0.0
        %1727 = vmatpush1.msra.mxu0 0.0
        %1728 = vmatprep.subr.mxu0 0.0
        %1729 = vmatpush1.msra.mxu0 0.0
        %1730 = vmatprep.subr.mxu0 0.0
        %1731 = vmatpush1.msra.mxu0 0.0
        %1732 = vmatprep.subr.mxu0 0.0
        %1733 = vmatpush1.msra.mxu0 0.0
        %1734 = vmatprep.subr.mxu0 0.0
        %1735 = vmatpush1.msra.mxu0 0.0
        %1736 = vmatprep.subr.mxu0 0.0
        %1737 = vmatpush1.msra.mxu0 0.0
        %1738 = vmatprep.mubr.f32.mxu0 0.0
        %1739 = vmatmul.mubr.f32.gmra.mrb[0].mxu0 %v1648
        %v1740 = vpop.f32.mrb[0].mxu0
        %v1741 = vadd.f32 %v1672, %v1740
        %v1742 = vpop.f32.mrb[0].mxu0
        %1743 = vdwg.mxu0
        %1744 = vmax.xlane.f32.xlu0 %v1741
        %v1745 = vpop.xlane.xlu0 %1744
        %v1746 = vsub.f32 %v1741, %v1745
        %v1747 = vmul.f32 %v1746, 1.442695
        %v1748 = vpow.pop %v1747
        %1749 = vadd.xlane.f32.xlu0 %v1748
        %v1750 = vpop.xlane.xlu0 %1749
        %v1751 = vlog2.pop %v1750
        %v1752 = vmul.f32 %v1751, 0.6931472
        %v1753 = vsub.f32 %v1746, %v1752
        %1754 = vst [vmem:[%s564] sm:$0xff] %v1753
        %s1755 = sand.u32 %s326, 1
        %s1756 = scalar_lea.sflag [#allocation4], %s1755
        %s1757 = sand.u32 %s326, 1
        %s1758 = smul.addr %s1757, 8
        %s1759 = scalar_lea.vmem [#allocation14], %s1758
        // Predicated region
        $region101: #{tpu_custom_call.1} parent=71 // pred_check
          %p1760 = pneg %p336
        $region102: #{tpu_custom_call.1} parent=71 // pred_check_branch
          %1762 = sbr.rel (%p1760) target = $region104
        $region103: #{tpu_custom_call.1} parent=71 // pred_region
          %s1764 = ssub.s32 128, 128
          %1765 = vsyncadd %s1756, %s1764
          %s1766 = smul.addr %s35, 128
          %s1767 = scalar_lea.hbm %s13, %s1766
          %s1769 = sshll.u32 %s1759, 4
          %s1770 = int_to_ptr.vmem [resolvable:$true] %s1769
          %1772 = dma.vmem_to_hbm [thread:$0]  %s1770, 128, %s1767, %s1756
        $region104: #{tpu_custom_call.1} parent=71 // pred_fallthru
          _
      $region72: #{tpu_custom_call.1} parent=5 // pred_fallthru
        _
      %p1773 = scmp.le.s32.totalorder 2, %s30
      // Predicated region
      $region105: #{tpu_custom_call.1} parent=5 // pred_check
        %p1774 = pneg %p1773
      $region106: #{tpu_custom_call.1} parent=5 // pred_check_branch
        %1776 = sbr.rel (%p1774) target = $region108
      $region107: #{tpu_custom_call.1} parent=5 // pred_region
        %s1777 = ssub.s32 %s30, 2
        // Predicated region
        $region109: #{tpu_custom_call.1} parent=107 // pred_check
          %p1778 = pneg %p342
        $region110: #{tpu_custom_call.1} parent=107 // pred_check_branch
          %1780 = sbr.rel (%p1778) target = $region112
        $region111: #{tpu_custom_call.1} parent=107 // pred_region
          %s1781 = sand.u32 %s327, 1
          %s1782 = scalar_lea.sflag [#allocation4], %s1781
          %s1783 = sand.u32 %s327, 1
          %s1784 = smul.addr %s1783, 8
          %s1785 = scalar_lea.vmem [#allocation14], %s1784
          %1786 = dma.done %s1782, 128
        $region112: #{tpu_custom_call.1} parent=107 // pred_fallthru
          _
      $region108: #{tpu_custom_call.1} parent=5 // pred_fallthru
        _
    $region6: #{tpu_custom_call.1} parent=1 // loop_footer
      %s34 = sadd.s32 1, %s30
    $region7: #{tpu_custom_call.1} parent=1 // loop_footer_branch
      %29 = sbr.rel target = $region3
    $region8: #{tpu_custom_call.1} parent=1 // loop_exit
      _
    %1787 = vsyncpa [#allocation3], 1
    %s1788 = scalar_lea.sflag [#allocation3], 1
    %1789 = vsyncpa %s1788, 1
    %1790 = vsyncpa [#allocation6], 1
    %s1791 = scalar_lea.sflag [#allocation6], 1
    %1792 = vsyncpa %s1791, 1
    %1793 = vsyncpa [#allocation9], 1
    %1794 = vsyncpa [#allocation12], 1
    %1795 = vsyncpa [#allocation4], 1
    %s1796 = scalar_lea.sflag [#allocation4], 1
    %1797 = vsyncpa %s1796, 1

</llo_original>
